<compile_context>
chip_gen: v5e
topology: v5e:2x2
jax: 0.10.0
libtpu: 0.0.40
codegen_flags: <defaults>
</compile_context>

<pallas_src>
import jax
import jax.numpy as jnp
from jax.experimental import pallas as pl
from jax.experimental.pallas import tpu as pltpu

BN_EPS = 1e-5
_LANE = 128
_SUBLANE = 8
_ROWS_MAX = 1024                      # rows of 128 lanes per grid step (~3 MiB xs block)
_VMEM_LIMIT = 40 * 1024 * 1024        # safe on v5e/v6e (128 MiB) and v7x (64 MiB)


def _cdiv(a, b):
    return -(-a // b)


def _round_up(a, b):
    return _cdiv(a, b) * b


def _stats_kernel(xs_ref, acc_ref):
    """Pass 1: per-channel input sums and CxC input Gram, accumulated into a
    resident (n_stats, 8, 128) partial-sum block (one per core split).
    Hot loop is full-vreg VPU mult/adds only: no cross-lane reductions and no
    masked stores per step."""
    i = pl.program_id(1)

    @pl.when(i == 0)
    def _():
        acc_ref[...] = jnp.zeros_like(acc_ref)

    c_in = xs_ref.shape[1]
    rb = xs_ref.shape[2]

    def part(v):
        # (rb, 128) -> (8, 128): layout-preserving sublane-tile view + vector adds.
        return jnp.sum(v.reshape(rb // _SUBLANE, _SUBLANE, _LANE), axis=0)

    xe = [xs_ref[0, c] for c in range(c_in)]   # (rb, 128) full-occupancy slabs
    xo = [xs_ref[1, c] for c in range(c_in)]

    for c in range(c_in):
        acc_ref[0, c] += part(xe[c] + xo[c])
    q = c_in
    for a in range(c_in):
        for b in range(a, c_in):
            acc_ref[0, q] += part(xe[a] * xe[b] + xo[a] * xo[b])
            q += 1


def _conv_bn_pool_kernel(w_ref, scale_ref, shift_ref, xs_ref, o_ref):
    """Pass 2: 1x1 conv (unrolled VPU form, scalar weights from SMEM), folded
    BN affine, MaxPool1d(2,2) as an elementwise max of the even/odd streams.
    All operands and stores are dense (rb, 128) slabs (unmasked vst)."""
    c_out = o_ref.shape[0]
    c_in = xs_ref.shape[1]

    xe = [xs_ref[0, c] for c in range(c_in)]   # hoisted: reused by every output channel
    xo = [xs_ref[1, c] for c in range(c_in)]

    for o in range(c_out):
        s = scale_ref[o]
        t = shift_ref[o]
        ze = w_ref[o, 0] * xe[0]
        zo = w_ref[o, 0] * xo[0]
        for c in range(1, c_in):
            w_oc = w_ref[o, c]
            ze = ze + w_oc * xe[c]
            zo = zo + w_oc * xo[c]
        o_ref[o] = jnp.maximum(ze * s + t, zo * s + t).astype(o_ref.dtype)


@jax.jit
def conv_bn_pool(x, w, b, gamma, beta):
    """x: (N, C, L) float32 (PyTorch NCL).  Returns (N, C_out, L // 2).
    `b` (conv bias) is accepted for API fidelity but is mathematically
    cancelled by the training-mode BN mean subtraction, so it is unused."""
    del b
    n, c_in, l = x.shape
    c_out = w.shape[0]
    l_half = l // 2                    # MaxPool1d(2,2) floors odd L (PyTorch behaviour)
    m_half = n * l_half

    # ---------------- tiling: lane-dense rows of 128, multi-MiB blocks -------
    mb_min = max(1, _cdiv(m_half, _LANE))
    num_chunks = 2 * max(1, _cdiv(mb_min, 2 * _ROWS_MAX))  # even -> 2-way pass-1 split
    rb = _round_up(_cdiv(mb_min, num_chunks), _SUBLANE)
    mb = num_chunks * rb
    nt1 = num_chunks // 2
    m_half_pad = mb * _LANE

    # ------- channel-major even/odd slab: one fused XLA relayout over x ------
    x_f = x.astype(jnp.float32)
    xt = jnp.transpose(x_f[:, :, : 2 * l_half], (1, 0, 2)).reshape(c_in, n * 2 * l_half)
    xs = jnp.stack([xt[:, 0::2], xt[:, 1::2]], axis=0)          # (2, C, m_half)
    xs = jnp.pad(xs, ((0, 0), (0, 0), (0, m_half_pad - m_half)))
    xs = xs.reshape(2, c_in, mb, _LANE)

    w2 = w.reshape(c_out, c_in).astype(jnp.float32)

    # ---------------- Pass 1: input sums + Gram (2-way parallel) -------------
    n_stats = c_in + (c_in * (c_in + 1)) // 2
    stats = pl.pallas_call(
        _stats_kernel,
        out_shape=jax.ShapeDtypeStruct((2, n_stats, _SUBLANE, _LANE), jnp.float32),
        grid_spec=pltpu.PrefetchScalarGridSpec(
            num_scalar_prefetch=0,
            grid=(2, nt1),
            in_specs=[pl.BlockSpec((2, c_in, rb, _LANE),
                                   lambda p, i: (0, 0, p * nt1 + i, 0))],
            out_specs=pl.BlockSpec((1, n_stats, _SUBLANE, _LANE),
                                   lambda p, i: (p, 0, 0, 0)),
        ),
        compiler_params=pltpu.CompilerParams(
            dimension_semantics=("parallel", "arbitrary"),
            vmem_limit_bytes=_VMEM_LIMIT),
    )(xs)

    # ------- fold conv weights + batch stats into one per-channel FMA --------
    acc = jnp.sum(stats, axis=(0, 2, 3))                 # (n_stats,), tiny reduction
    s_x = acc[:c_in]
    g_flat = acc[c_in:]
    if l % 2 == 1:                     # pool drops the last column, BN does not
        tail = x_f[:, :, l - 1]                          # (N, C)
        s_x = s_x + jnp.sum(tail, axis=0)
        g_extra = tail.T @ tail
    else:
        g_extra = None
    gram = jnp.zeros((c_in, c_in), jnp.float32)
    q = 0
    for a in range(c_in):
        for bb in range(a, c_in):
            gram = gram.at[a, bb].set(g_flat[q])
            if bb != a:
                gram = gram.at[bb, a].set(g_flat[q])
            q += 1
    if g_extra is not None:
        gram = gram + g_extra

    count = jnp.float32(n * l)
    sum_y = w2 @ s_x                                     # bias-less conv output sums
    mean = sum_y / count
    sumsq_y = jnp.einsum('oa,ab,ob->o', w2, gram, w2)
    # NOTE: single-pass E[y^2]-E[y]^2 variance (clamped); fine for normalized
    # inputs, may lose precision when |mean| >> std.
    var = jnp.maximum(sumsq_y / count - mean * mean, 0.0)
    scale = gamma.astype(jnp.float32) * jax.lax.rsqrt(var + BN_EPS)
    shift = beta.astype(jnp.float32) - mean * scale

    # ---------------- Pass 2: conv + folded BN + max-pool ---------------------
    out_slab = pl.pallas_call(
        _conv_bn_pool_kernel,
        out_shape=jax.ShapeDtypeStruct((c_out, mb, _LANE), jnp.float32),
        grid_spec=pltpu.PrefetchScalarGridSpec(
            num_scalar_prefetch=0,
            grid=(num_chunks,),
            in_specs=[
                pl.BlockSpec(memory_space=pltpu.MemorySpace.SMEM),   # weights (C_out, C_in)
                pl.BlockSpec(memory_space=pltpu.MemorySpace.SMEM),   # scale   (C_out,)
                pl.BlockSpec(memory_space=pltpu.MemorySpace.SMEM),   # shift   (C_out,)
                pl.BlockSpec((2, c_in, rb, _LANE), lambda i: (0, 0, i, 0)),
            ],
            out_specs=pl.BlockSpec((c_out, rb, _LANE), lambda i: (0, i, 0)),
        ),
        compiler_params=pltpu.CompilerParams(
            dimension_semantics=("parallel",),
            vmem_limit_bytes=_VMEM_LIMIT),
    )(w2, scale, shift, xs)

    out = out_slab.reshape(c_out, m_half_pad)[:, :m_half]
    out = out.reshape(c_out, n, l_half)
    return jnp.transpose(out, (1, 0, 2))


def _reference(x, w, b, gamma, beta):
    # Pure-JAX Conv1d(k=1, bias) + BatchNorm1d(train) + MaxPool1d(2,2).
    c_out, c_in = w.shape[0], w.shape[1]
    y = jnp.einsum('oc,ncl->nol', w.reshape(c_out, c_in), x) + b[None, :, None]
    mean = jnp.mean(y, axis=(0, 2), keepdims=True)
    var = jnp.mean((y - mean) ** 2, axis=(0, 2), keepdims=True)
    y = (y - mean) / jnp.sqrt(var + BN_EPS) * gamma[None, :, None] + beta[None, :, None]
    n, c, l = y.shape
    lh = l // 2
    return jnp.max(y[:, :, :2 * lh].reshape(n, c, lh, 2), axis=-1)


if __name__ == "__main__":
    key = jax.random.PRNGKey(0)
    k_x, k_w, k_b = jax.random.split(key, 3)

    N, C, L = 1, 3, 32
    x = jax.random.normal(k_x, (N, C, L), dtype=jnp.float32)

    # Conv1d(3, 3, 1) parameters (PyTorch-style uniform init bound).
    fan_in = C * 1
    bound = 1.0 / (fan_in ** 0.5)
    w = jax.random.uniform(k_w, (C, C, 1), minval=-bound, maxval=bound,
                           dtype=jnp.float32)
    b = jax.random.uniform(k_b, (C,), minval=-bound, maxval=bound,
                           dtype=jnp.float32)
    # BatchNorm1d(3) defaults: gamma = 1, beta = 0.
    gamma = jnp.ones((C,), dtype=jnp.float32)
    beta = jnp.zeros((C,), dtype=jnp.float32)

    out = conv_bn_pool(x, w, b, gamma, beta)
    jax.block_until_ready(out)

    ref = _reference(x, w, b, gamma, beta)
    assert out.shape == (N, C, L // 2), out.shape
    assert jnp.allclose(out, ref, atol=1e-4, rtol=1e-4), "mismatch vs reference"

    print("KERNEL_OK")
</pallas_src>

<mosaic_0001>
module attributes {stable_mosaic.version = 11 : i64} {
  func.func @_stats_kernel(%arg0: i32, %arg1: i32, %arg2: memref<2x3x8x128xf32, #tpu.memory_space<vmem>>, %arg3: memref<1x9x8x128xf32, #tpu.memory_space<vmem>>) attributes {dimension_semantics = [#tpu.dimension_semantics<parallel>, #tpu.dimension_semantics<arbitrary>], iteration_bounds = array<i64: 2, 1>, scalar_prefetch = 0 : i64, scratch_operands = 0 : i64, tpu.core_type = #tpu.core_type<tc>, window_params = [{transform_indices = @transform_0, window_bounds = array<i64: 2, 3, 8, 128>}, {transform_indices = @transform_1, window_bounds = array<i64: 1, 9, 8, 128>}]} {
    %c0_i32 = arith.constant 0 : i32
    %0 = arith.cmpi eq, %arg1, %c0_i32 : i32
    %1 = arith.extui %0 : i1 to i32
    %c0_i32_0 = arith.constant 0 : i32
    %2 = arith.cmpi ne, %1, %c0_i32_0 : i32
    scf.if %2 {
      %cst_96 = arith.constant 0.000000e+00 : f32
      %108 = vector.broadcast %cst_96 : f32 to vector<1x9x8x128xf32>
      %c0_97 = arith.constant 0 : index
      %c0_98 = arith.constant 0 : index
      %c0_99 = arith.constant 0 : index
      %c0_100 = arith.constant 0 : index
      %109 = vector.load %arg3[%c0_97, %c0_98, %c0_99, %c0_100] : memref<1x9x8x128xf32, #tpu.memory_space<vmem>>, vector<1x9x8x128xf32>
      tpu.vector_store %arg3[%c0_97, %c0_98, %c0_99, %c0_100], %108 {strides = array<i32>} : memref<1x9x8x128xf32, #tpu.memory_space<vmem>>, vector<1x9x8x128xf32>,
    } else {
    }
    %c0 = arith.constant 0 : index
    %c0_1 = arith.constant 0 : index
    %c0_2 = arith.constant 0 : index
    %c0_3 = arith.constant 0 : index
    %3 = vector.load %arg2[%c0, %c0_1, %c0_2, %c0_3] : memref<2x3x8x128xf32, #tpu.memory_space<vmem>>, vector<1x1x8x128xf32>
    %4 = vector.shape_cast %3 : vector<1x1x8x128xf32> to vector<8x128xf32>
    %c0_4 = arith.constant 0 : index
    %c1 = arith.constant 1 : index
    %c0_5 = arith.constant 0 : index
    %c0_6 = arith.constant 0 : index
    %5 = vector.load %arg2[%c0_4, %c1, %c0_5, %c0_6] : memref<2x3x8x128xf32, #tpu.memory_space<vmem>>, vector<1x1x8x128xf32>
    %6 = vector.shape_cast %5 : vector<1x1x8x128xf32> to vector<8x128xf32>
    %c0_7 = arith.constant 0 : index
    %c2 = arith.constant 2 : index
    %c0_8 = arith.constant 0 : index
    %c0_9 = arith.constant 0 : index
    %7 = vector.load %arg2[%c0_7, %c2, %c0_8, %c0_9] : memref<2x3x8x128xf32, #tpu.memory_space<vmem>>, vector<1x1x8x128xf32>
    %8 = vector.shape_cast %7 : vector<1x1x8x128xf32> to vector<8x128xf32>
    %c1_10 = arith.constant 1 : index
    %c0_11 = arith.constant 0 : index
    %c0_12 = arith.constant 0 : index
    %c0_13 = arith.constant 0 : index
    %9 = vector.load %arg2[%c1_10, %c0_11, %c0_12, %c0_13] : memref<2x3x8x128xf32, #tpu.memory_space<vmem>>, vector<1x1x8x128xf32>
    %10 = vector.shape_cast %9 : vector<1x1x8x128xf32> to vector<8x128xf32>
    %c1_14 = arith.constant 1 : index
    %c1_15 = arith.constant 1 : index
    %c0_16 = arith.constant 0 : index
    %c0_17 = arith.constant 0 : index
    %11 = vector.load %arg2[%c1_14, %c1_15, %c0_16, %c0_17] : memref<2x3x8x128xf32, #tpu.memory_space<vmem>>, vector<1x1x8x128xf32>
    %12 = vector.shape_cast %11 : vector<1x1x8x128xf32> to vector<8x128xf32>
    %c1_18 = arith.constant 1 : index
    %c2_19 = arith.constant 2 : index
    %c0_20 = arith.constant 0 : index
    %c0_21 = arith.constant 0 : index
    %13 = vector.load %arg2[%c1_18, %c2_19, %c0_20, %c0_21] : memref<2x3x8x128xf32, #tpu.memory_space<vmem>>, vector<1x1x8x128xf32>
    %14 = vector.shape_cast %13 : vector<1x1x8x128xf32> to vector<8x128xf32>
    %c0_22 = arith.constant 0 : index
    %c0_23 = arith.constant 0 : index
    %c0_24 = arith.constant 0 : index
    %c0_25 = arith.constant 0 : index
    %15 = vector.load %arg3[%c0_22, %c0_23, %c0_24, %c0_25] : memref<1x9x8x128xf32, #tpu.memory_space<vmem>>, vector<1x1x8x128xf32>
    %16 = vector.shape_cast %15 : vector<1x1x8x128xf32> to vector<8x128xf32>
    %17 = arith.addf %4, %10 : vector<8x128xf32>
    %18 = vector.shape_cast %17 : vector<8x128xf32> to vector<1x8x128xf32>
    %cst = arith.constant dense<0.000000e+00> : vector<8x128xf32>
    %19 = vector.multi_reduction <add>, %18, %cst [0] : vector<1x8x128xf32> to vector<8x128xf32>
    %20 = arith.addf %16, %19 : vector<8x128xf32>
    %c0_26 = arith.constant 0 : index
    %c0_27 = arith.constant 0 : index
    %c0_28 = arith.constant 0 : index
    %c0_29 = arith.constant 0 : index
    %21 = vector.load %arg3[%c0_26, %c0_27, %c0_28, %c0_29] : memref<1x9x8x128xf32, #tpu.memory_space<vmem>>, vector<1x1x8x128xf32>
    %22 = vector.shape_cast %21 : vector<1x1x8x128xf32> to vector<8x128xf32>
    %23 = vector.shape_cast %20 : vector<8x128xf32> to vector<1x1x8x128xf32>
    tpu.vector_store %arg3[%c0_26, %c0_27, %c0_28, %c0_29], %23 {strides = array<i32>} : memref<1x9x8x128xf32, #tpu.memory_space<vmem>>, vector<1x1x8x128xf32>,
    %c0_30 = arith.constant 0 : index
    %c1_31 = arith.constant 1 : index
    %c0_32 = arith.constant 0 : index
    %c0_33 = arith.constant 0 : index
    %24 = vector.load %arg3[%c0_30, %c1_31, %c0_32, %c0_33] : memref<1x9x8x128xf32, #tpu.memory_space<vmem>>, vector<1x1x8x128xf32>
    %25 = vector.shape_cast %24 : vector<1x1x8x128xf32> to vector<8x128xf32>
    %26 = arith.addf %6, %12 : vector<8x128xf32>
    %27 = vector.shape_cast %26 : vector<8x128xf32> to vector<1x8x128xf32>
    %cst_34 = arith.constant dense<0.000000e+00> : vector<8x128xf32>
    %28 = vector.multi_reduction <add>, %27, %cst_34 [0] : vector<1x8x128xf32> to vector<8x128xf32>
    %29 = arith.addf %25, %28 : vector<8x128xf32>
    %c0_35 = arith.constant 0 : index
    %c1_36 = arith.constant 1 : index
    %c0_37 = arith.constant 0 : index
    %c0_38 = arith.constant 0 : index
    %30 = vector.load %arg3[%c0_35, %c1_36, %c0_37, %c0_38] : memref<1x9x8x128xf32, #tpu.memory_space<vmem>>, vector<1x1x8x128xf32>
    %31 = vector.shape_cast %30 : vector<1x1x8x128xf32> to vector<8x128xf32>
    %32 = vector.shape_cast %29 : vector<8x128xf32> to vector<1x1x8x128xf32>
    tpu.vector_store %arg3[%c0_35, %c1_36, %c0_37, %c0_38], %32 {strides = array<i32>} : memref<1x9x8x128xf32, #tpu.memory_space<vmem>>, vector<1x1x8x128xf32>,
    %c0_39 = arith.constant 0 : index
    %c2_40 = arith.constant 2 : index
    %c0_41 = arith.constant 0 : index
    %c0_42 = arith.constant 0 : index
    %33 = vector.load %arg3[%c0_39, %c2_40, %c0_41, %c0_42] : memref<1x9x8x128xf32, #tpu.memory_space<vmem>>, vector<1x1x8x128xf32>
    %34 = vector.shape_cast %33 : vector<1x1x8x128xf32> to vector<8x128xf32>
    %35 = arith.addf %8, %14 : vector<8x128xf32>
    %36 = vector.shape_cast %35 : vector<8x128xf32> to vector<1x8x128xf32>
    %cst_43 = arith.constant dense<0.000000e+00> : vector<8x128xf32>
    %37 = vector.multi_reduction <add>, %36, %cst_43 [0] : vector<1x8x128xf32> to vector<8x128xf32>
    %38 = arith.addf %34, %37 : vector<8x128xf32>
    %c0_44 = arith.constant 0 : index
    %c2_45 = arith.constant 2 : index
    %c0_46 = arith.constant 0 : index
    %c0_47 = arith.constant 0 : index
    %39 = vector.load %arg3[%c0_44, %c2_45, %c0_46, %c0_47] : memref<1x9x8x128xf32, #tpu.memory_space<vmem>>, vector<1x1x8x128xf32>
    %40 = vector.shape_cast %39 : vector<1x1x8x128xf32> to vector<8x128xf32>
    %41 = vector.shape_cast %38 : vector<8x128xf32> to vector<1x1x8x128xf32>
    tpu.vector_store %arg3[%c0_44, %c2_45, %c0_46, %c0_47], %41 {strides = array<i32>} : memref<1x9x8x128xf32, #tpu.memory_space<vmem>>, vector<1x1x8x128xf32>,
    %c0_48 = arith.constant 0 : index
    %c3 = arith.constant 3 : index
    %c0_49 = arith.constant 0 : index
    %c0_50 = arith.constant 0 : index
    %42 = vector.load %arg3[%c0_48, %c3, %c0_49, %c0_50] : memref<1x9x8x128xf32, #tpu.memory_space<vmem>>, vector<1x1x8x128xf32>
    %43 = vector.shape_cast %42 : vector<1x1x8x128xf32> to vector<8x128xf32>
    %44 = arith.mulf %4, %4 : vector<8x128xf32>
    %45 = arith.mulf %10, %10 : vector<8x128xf32>
    %46 = arith.addf %44, %45 : vector<8x128xf32>
    %47 = vector.shape_cast %46 : vector<8x128xf32> to vector<1x8x128xf32>
    %cst_51 = arith.constant dense<0.000000e+00> : vector<8x128xf32>
    %48 = vector.multi_reduction <add>, %47, %cst_51 [0] : vector<1x8x128xf32> to vector<8x128xf32>
    %49 = arith.addf %43, %48 : vector<8x128xf32>
    %c0_52 = arith.constant 0 : index
    %c3_53 = arith.constant 3 : index
    %c0_54 = arith.constant 0 : index
    %c0_55 = arith.constant 0 : index
    %50 = vector.load %arg3[%c0_52, %c3_53, %c0_54, %c0_55] : memref<1x9x8x128xf32, #tpu.memory_space<vmem>>, vector<1x1x8x128xf32>
    %51 = vector.shape_cast %50 : vector<1x1x8x128xf32> to vector<8x128xf32>
    %52 = vector.shape_cast %49 : vector<8x128xf32> to vector<1x1x8x128xf32>
    tpu.vector_store %arg3[%c0_52, %c3_53, %c0_54, %c0_55], %52 {strides = array<i32>} : memref<1x9x8x128xf32, #tpu.memory_space<vmem>>, vector<1x1x8x128xf32>,
    %c0_56 = arith.constant 0 : index
    %c4 = arith.constant 4 : index
    %c0_57 = arith.constant 0 : index
    %c0_58 = arith.constant 0 : index
    %53 = vector.load %arg3[%c0_56, %c4, %c0_57, %c0_58] : memref<1x9x8x128xf32, #tpu.memory_space<vmem>>, vector<1x1x8x128xf32>
    %54 = vector.shape_cast %53 : vector<1x1x8x128xf32> to vector<8x128xf32>
    %55 = arith.mulf %4, %6 : vector<8x128xf32>
    %56 = arith.mulf %10, %12 : vector<8x128xf32>
    %57 = arith.addf %55, %56 : vector<8x128xf32>
    %58 = vector.shape_cast %57 : vector<8x128xf32> to vector<1x8x128xf32>
    %cst_59 = arith.constant dense<0.000000e+00> : vector<8x128xf32>
    %59 = vector.multi_reduction <add>, %58, %cst_59 [0] : vector<1x8x128xf32> to vector<8x128xf32>
    %60 = arith.addf %54, %59 : vector<8x128xf32>
    %c0_60 = arith.constant 0 : index
    %c4_61 = arith.constant 4 : index
    %c0_62 = arith.constant 0 : index
    %c0_63 = arith.constant 0 : index
    %61 = vector.load %arg3[%c0_60, %c4_61, %c0_62, %c0_63] : memref<1x9x8x128xf32, #tpu.memory_space<vmem>>, vector<1x1x8x128xf32>
    %62 = vector.shape_cast %61 : vector<1x1x8x128xf32> to vector<8x128xf32>
    %63 = vector.shape_cast %60 : vector<8x128xf32> to vector<1x1x8x128xf32>
    tpu.vector_store %arg3[%c0_60, %c4_61, %c0_62, %c0_63], %63 {strides = array<i32>} : memref<1x9x8x128xf32, #tpu.memory_space<vmem>>, vector<1x1x8x128xf32>,
    %c0_64 = arith.constant 0 : index
    %c5 = arith.constant 5 : index
    %c0_65 = arith.constant 0 : index
    %c0_66 = arith.constant 0 : index
    %64 = vector.load %arg3[%c0_64, %c5, %c0_65, %c0_66] : memref<1x9x8x128xf32, #tpu.memory_space<vmem>>, vector<1x1x8x128xf32>
    %65 = vector.shape_cast %64 : vector<1x1x8x128xf32> to vector<8x128xf32>
    %66 = arith.mulf %4, %8 : vector<8x128xf32>
    %67 = arith.mulf %10, %14 : vector<8x128xf32>
    %68 = arith.addf %66, %67 : vector<8x128xf32>
    %69 = vector.shape_cast %68 : vector<8x128xf32> to vector<1x8x128xf32>
    %cst_67 = arith.constant dense<0.000000e+00> : vector<8x128xf32>
    %70 = vector.multi_reduction <add>, %69, %cst_67 [0] : vector<1x8x128xf32> to vector<8x128xf32>
    %71 = arith.addf %65, %70 : vector<8x128xf32>
    %c0_68 = arith.constant 0 : index
    %c5_69 = arith.constant 5 : index
    %c0_70 = arith.constant 0 : index
    %c0_71 = arith.constant 0 : index
    %72 = vector.load %arg3[%c0_68, %c5_69, %c0_70, %c0_71] : memref<1x9x8x128xf32, #tpu.memory_space<vmem>>, vector<1x1x8x128xf32>
    %73 = vector.shape_cast %72 : vector<1x1x8x128xf32> to vector<8x128xf32>
    %74 = vector.shape_cast %71 : vector<8x128xf32> to vector<1x1x8x128xf32>
    tpu.vector_store %arg3[%c0_68, %c5_69, %c0_70, %c0_71], %74 {strides = array<i32>} : memref<1x9x8x128xf32, #tpu.memory_space<vmem>>, vector<1x1x8x128xf32>,
    %c0_72 = arith.constant 0 : index
    %c6 = arith.constant 6 : index
    %c0_73 = arith.constant 0 : index
    %c0_74 = arith.constant 0 : index
    %75 = vector.load %arg3[%c0_72, %c6, %c0_73, %c0_74] : memref<1x9x8x128xf32, #tpu.memory_space<vmem>>, vector<1x1x8x128xf32>
    %76 = vector.shape_cast %75 : vector<1x1x8x128xf32> to vector<8x128xf32>
    %77 = arith.mulf %6, %6 : vector<8x128xf32>
    %78 = arith.mulf %12, %12 : vector<8x128xf32>
    %79 = arith.addf %77, %78 : vector<8x128xf32>
    %80 = vector.shape_cast %79 : vector<8x128xf32> to vector<1x8x128xf32>
    %cst_75 = arith.constant dense<0.000000e+00> : vector<8x128xf32>
    %81 = vector.multi_reduction <add>, %80, %cst_75 [0] : vector<1x8x128xf32> to vector<8x128xf32>
    %82 = arith.addf %76, %81 : vector<8x128xf32>
    %c0_76 = arith.constant 0 : index
    %c6_77 = arith.constant 6 : index
    %c0_78 = arith.constant 0 : index
    %c0_79 = arith.constant 0 : index
    %83 = vector.load %arg3[%c0_76, %c6_77, %c0_78, %c0_79] : memref<1x9x8x128xf32, #tpu.memory_space<vmem>>, vector<1x1x8x128xf32>
    %84 = vector.shape_cast %83 : vector<1x1x8x128xf32> to vector<8x128xf32>
    %85 = vector.shape_cast %82 : vector<8x128xf32> to vector<1x1x8x128xf32>
    tpu.vector_store %arg3[%c0_76, %c6_77, %c0_78, %c0_79], %85 {strides = array<i32>} : memref<1x9x8x128xf32, #tpu.memory_space<vmem>>, vector<1x1x8x128xf32>,
    %c0_80 = arith.constant 0 : index
    %c7 = arith.constant 7 : index
    %c0_81 = arith.constant 0 : index
    %c0_82 = arith.constant 0 : index
    %86 = vector.load %arg3[%c0_80, %c7, %c0_81, %c0_82] : memref<1x9x8x128xf32, #tpu.memory_space<vmem>>, vector<1x1x8x128xf32>
    %87 = vector.shape_cast %86 : vector<1x1x8x128xf32> to vector<8x128xf32>
    %88 = arith.mulf %6, %8 : vector<8x128xf32>
    %89 = arith.mulf %12, %14 : vector<8x128xf32>
    %90 = arith.addf %88, %89 : vector<8x128xf32>
    %91 = vector.shape_cast %90 : vector<8x128xf32> to vector<1x8x128xf32>
    %cst_83 = arith.constant dense<0.000000e+00> : vector<8x128xf32>
    %92 = vector.multi_reduction <add>, %91, %cst_83 [0] : vector<1x8x128xf32> to vector<8x128xf32>
    %93 = arith.addf %87, %92 : vector<8x128xf32>
    %c0_84 = arith.constant 0 : index
    %c7_85 = arith.constant 7 : index
    %c0_86 = arith.constant 0 : index
    %c0_87 = arith.constant 0 : index
    %94 = vector.load %arg3[%c0_84, %c7_85, %c0_86, %c0_87] : memref<1x9x8x128xf32, #tpu.memory_space<vmem>>, vector<1x1x8x128xf32>
    %95 = vector.shape_cast %94 : vector<1x1x8x128xf32> to vector<8x128xf32>
    %96 = vector.shape_cast %93 : vector<8x128xf32> to vector<1x1x8x128xf32>
    tpu.vector_store %arg3[%c0_84, %c7_85, %c0_86, %c0_87], %96 {strides = array<i32>} : memref<1x9x8x128xf32, #tpu.memory_space<vmem>>, vector<1x1x8x128xf32>,
    %c0_88 = arith.constant 0 : index
    %c8 = arith.constant 8 : index
    %c0_89 = arith.constant 0 : index
    %c0_90 = arith.constant 0 : index
    %97 = vector.load %arg3[%c0_88, %c8, %c0_89, %c0_90] : memref<1x9x8x128xf32, #tpu.memory_space<vmem>>, vector<1x1x8x128xf32>
    %98 = vector.shape_cast %97 : vector<1x1x8x128xf32> to vector<8x128xf32>
    %99 = arith.mulf %8, %8 : vector<8x128xf32>
    %100 = arith.mulf %14, %14 : vector<8x128xf32>
    %101 = arith.addf %99, %100 : vector<8x128xf32>
    %102 = vector.shape_cast %101 : vector<8x128xf32> to vector<1x8x128xf32>
    %cst_91 = arith.constant dense<0.000000e+00> : vector<8x128xf32>
    %103 = vector.multi_reduction <add>, %102, %cst_91 [0] : vector<1x8x128xf32> to vector<8x128xf32>
    %104 = arith.addf %98, %103 : vector<8x128xf32>
    %c0_92 = arith.constant 0 : index
    %c8_93 = arith.constant 8 : index
    %c0_94 = arith.constant 0 : index
    %c0_95 = arith.constant 0 : index
    %105 = vector.load %arg3[%c0_92, %c8_93, %c0_94, %c0_95] : memref<1x9x8x128xf32, #tpu.memory_space<vmem>>, vector<1x1x8x128xf32>
    %106 = vector.shape_cast %105 : vector<1x1x8x128xf32> to vector<8x128xf32>
    %107 = vector.shape_cast %104 : vector<8x128xf32> to vector<1x1x8x128xf32>
    tpu.vector_store %arg3[%c0_92, %c8_93, %c0_94, %c0_95], %107 {strides = array<i32>} : memref<1x9x8x128xf32, #tpu.memory_space<vmem>>, vector<1x1x8x128xf32>,
    return
  }
  func.func @transform_0(%arg0: i32, %arg1: i32) -> (i32, i32, i32, i32) {
    %c1_i32 = arith.constant 1 : i32
    %0 = arith.muli %arg0, %c1_i32 : i32
    %1 = arith.addi %0, %arg1 : i32
    %c0_i32 = arith.constant 0 : i32
    %c0_i32_0 = arith.constant 0 : i32
    %c0_i32_1 = arith.constant 0 : i32
    %c0_i32_2 = arith.constant 0 : i32
    return %c0_i32, %c0_i32_0, %1, %c0_i32_1 : i32, i32, i32, i32
  }
  func.func @transform_1(%arg0: i32, %arg1: i32) -> (i32, i32, i32, i32) {
    %c0_i32 = arith.constant 0 : i32
    %c0_i32_0 = arith.constant 0 : i32
    %c0_i32_1 = arith.constant 0 : i32
    %c0_i32_2 = arith.constant 0 : i32
    return %arg0, %c0_i32, %c0_i32_0, %c0_i32_1 : i32, i32, i32, i32
  }
}

module attributes {stable_mosaic.version = 11 : i64} {
  func.func @_conv_bn_pool_kernel(%arg0: i32, %arg1: memref<3x3xf32, #tpu.memory_space<smem>>, %arg2: memref<3xf32, #tpu.memory_space<smem>>, %arg3: memref<3xf32, #tpu.memory_space<smem>>, %arg4: memref<2x3x8x128xf32, #tpu.memory_space<vmem>>, %arg5: memref<3x8x128xf32, #tpu.memory_space<vmem>>) attributes {dimension_semantics = [#tpu.dimension_semantics<parallel>], iteration_bounds = array<i64: 2>, scalar_prefetch = 0 : i64, scratch_operands = 0 : i64, tpu.core_type = #tpu.core_type<tc>, window_params = [{transform_indices = @transform_0, window_bounds = array<i64: 3, 3>}, {transform_indices = @transform_1, window_bounds = array<i64: 3>}, {transform_indices = @transform_2, window_bounds = array<i64: 3>}, {transform_indices = @transform_3, window_bounds = array<i64: 2, 3, 8, 128>}, {transform_indices = @transform_4, window_bounds = array<i64: 3, 8, 128>}]} {
    %c0 = arith.constant 0 : index
    %c0_0 = arith.constant 0 : index
    %c0_1 = arith.constant 0 : index
    %c0_2 = arith.constant 0 : index
    %0 = vector.load %arg4[%c0, %c0_0, %c0_1, %c0_2] : memref<2x3x8x128xf32, #tpu.memory_space<vmem>>, vector<1x1x8x128xf32>
    %1 = vector.shape_cast %0 : vector<1x1x8x128xf32> to vector<8x128xf32>
    %c0_3 = arith.constant 0 : index
    %c1 = arith.constant 1 : index
    %c0_4 = arith.constant 0 : index
    %c0_5 = arith.constant 0 : index
    %2 = vector.load %arg4[%c0_3, %c1, %c0_4, %c0_5] : memref<2x3x8x128xf32, #tpu.memory_space<vmem>>, vector<1x1x8x128xf32>
    %3 = vector.shape_cast %2 : vector<1x1x8x128xf32> to vector<8x128xf32>
    %c0_6 = arith.constant 0 : index
    %c2 = arith.constant 2 : index
    %c0_7 = arith.constant 0 : index
    %c0_8 = arith.constant 0 : index
    %4 = vector.load %arg4[%c0_6, %c2, %c0_7, %c0_8] : memref<2x3x8x128xf32, #tpu.memory_space<vmem>>, vector<1x1x8x128xf32>
    %5 = vector.shape_cast %4 : vector<1x1x8x128xf32> to vector<8x128xf32>
    %c1_9 = arith.constant 1 : index
    %c0_10 = arith.constant 0 : index
    %c0_11 = arith.constant 0 : index
    %c0_12 = arith.constant 0 : index
    %6 = vector.load %arg4[%c1_9, %c0_10, %c0_11, %c0_12] : memref<2x3x8x128xf32, #tpu.memory_space<vmem>>, vector<1x1x8x128xf32>
    %7 = vector.shape_cast %6 : vector<1x1x8x128xf32> to vector<8x128xf32>
    %c1_13 = arith.constant 1 : index
    %c1_14 = arith.constant 1 : index
    %c0_15 = arith.constant 0 : index
    %c0_16 = arith.constant 0 : index
    %8 = vector.load %arg4[%c1_13, %c1_14, %c0_15, %c0_16] : memref<2x3x8x128xf32, #tpu.memory_space<vmem>>, vector<1x1x8x128xf32>
    %9 = vector.shape_cast %8 : vector<1x1x8x128xf32> to vector<8x128xf32>
    %c1_17 = arith.constant 1 : index
    %c2_18 = arith.constant 2 : index
    %c0_19 = arith.constant 0 : index
    %c0_20 = arith.constant 0 : index
    %10 = vector.load %arg4[%c1_17, %c2_18, %c0_19, %c0_20] : memref<2x3x8x128xf32, #tpu.memory_space<vmem>>, vector<1x1x8x128xf32>
    %11 = vector.shape_cast %10 : vector<1x1x8x128xf32> to vector<8x128xf32>
    %c0_21 = arith.constant 0 : index
    %12 = memref.load %arg2[%c0_21] : memref<3xf32, #tpu.memory_space<smem>>
    %c0_22 = arith.constant 0 : index
    %13 = memref.load %arg3[%c0_22] : memref<3xf32, #tpu.memory_space<smem>>
    %c0_23 = arith.constant 0 : index
    %c0_24 = arith.constant 0 : index
    %14 = memref.load %arg1[%c0_23, %c0_24] : memref<3x3xf32, #tpu.memory_space<smem>>
    %15 = vector.broadcast %14 : f32 to vector<8x128xf32>
    %16 = arith.mulf %15, %1 : vector<8x128xf32>
    %c0_25 = arith.constant 0 : index
    %c0_26 = arith.constant 0 : index
    %17 = memref.load %arg1[%c0_25, %c0_26] : memref<3x3xf32, #tpu.memory_space<smem>>
    %18 = vector.broadcast %17 : f32 to vector<8x128xf32>
    %19 = arith.mulf %18, %7 : vector<8x128xf32>
    %c0_27 = arith.constant 0 : index
    %c1_28 = arith.constant 1 : index
    %20 = memref.load %arg1[%c0_27, %c1_28] : memref<3x3xf32, #tpu.memory_space<smem>>
    %21 = vector.broadcast %20 : f32 to vector<8x128xf32>
    %22 = arith.mulf %21, %3 : vector<8x128xf32>
    %23 = arith.addf %16, %22 : vector<8x128xf32>
    %24 = vector.broadcast %20 : f32 to vector<8x128xf32>
    %25 = arith.mulf %24, %9 : vector<8x128xf32>
    %26 = arith.addf %19, %25 : vector<8x128xf32>
    %c0_29 = arith.constant 0 : index
    %c2_30 = arith.constant 2 : index
    %27 = memref.load %arg1[%c0_29, %c2_30] : memref<3x3xf32, #tpu.memory_space<smem>>
    %28 = vector.broadcast %27 : f32 to vector<8x128xf32>
    %29 = arith.mulf %28, %5 : vector<8x128xf32>
    %30 = arith.addf %23, %29 : vector<8x128xf32>
    %31 = vector.broadcast %27 : f32 to vector<8x128xf32>
    %32 = arith.mulf %31, %11 : vector<8x128xf32>
    %33 = arith.addf %26, %32 : vector<8x128xf32>
    %34 = vector.broadcast %12 : f32 to vector<8x128xf32>
    %35 = arith.mulf %30, %34 : vector<8x128xf32>
    %36 = vector.broadcast %13 : f32 to vector<8x128xf32>
    %37 = arith.addf %35, %36 : vector<8x128xf32>
    %38 = vector.broadcast %12 : f32 to vector<8x128xf32>
    %39 = arith.mulf %33, %38 : vector<8x128xf32>
    %40 = vector.broadcast %13 : f32 to vector<8x128xf32>
    %41 = arith.addf %39, %40 : vector<8x128xf32>
    %42 = arith.maximumf %37, %41 : vector<8x128xf32>
    %c0_31 = arith.constant 0 : index
    %c0_32 = arith.constant 0 : index
    %c0_33 = arith.constant 0 : index
    %43 = vector.load %arg5[%c0_31, %c0_32, %c0_33] : memref<3x8x128xf32, #tpu.memory_space<vmem>>, vector<1x8x128xf32>
    %44 = vector.shape_cast %43 : vector<1x8x128xf32> to vector<8x128xf32>
    %45 = vector.shape_cast %42 : vector<8x128xf32> to vector<1x8x128xf32>
    tpu.vector_store %arg5[%c0_31, %c0_32, %c0_33], %45 {strides = array<i32>} : memref<3x8x128xf32, #tpu.memory_space<vmem>>, vector<1x8x128xf32>,
    %c1_34 = arith.constant 1 : index
    %46 = memref.load %arg2[%c1_34] : memref<3xf32, #tpu.memory_space<smem>>
    %c1_35 = arith.constant 1 : index
    %47 = memref.load %arg3[%c1_35] : memref<3xf32, #tpu.memory_space<smem>>
    %c1_36 = arith.constant 1 : index
    %c0_37 = arith.constant 0 : index
    %48 = memref.load %arg1[%c1_36, %c0_37] : memref<3x3xf32, #tpu.memory_space<smem>>
    %49 = vector.broadcast %48 : f32 to vector<8x128xf32>
    %50 = arith.mulf %49, %1 : vector<8x128xf32>
    %c1_38 = arith.constant 1 : index
    %c0_39 = arith.constant 0 : index
    %51 = memref.load %arg1[%c1_38, %c0_39] : memref<3x3xf32, #tpu.memory_space<smem>>
    %52 = vector.broadcast %51 : f32 to vector<8x128xf32>
    %53 = arith.mulf %52, %7 : vector<8x128xf32>
    %c1_40 = arith.constant 1 : index
    %c1_41 = arith.constant 1 : index
    %54 = memref.load %arg1[%c1_40, %c1_41] : memref<3x3xf32, #tpu.memory_space<smem>>
    %55 = vector.broadcast %54 : f32 to vector<8x128xf32>
    %56 = arith.mulf %55, %3 : vector<8x128xf32>
    %57 = arith.addf %50, %56 : vector<8x128xf32>
    %58 = vector.broadcast %54 : f32 to vector<8x128xf32>
    %59 = arith.mulf %58, %9 : vector<8x128xf32>
    %60 = arith.addf %53, %59 : vector<8x128xf32>
    %c1_42 = arith.constant 1 : index
    %c2_43 = arith.constant 2 : index
    %61 = memref.load %arg1[%c1_42, %c2_43] : memref<3x3xf32, #tpu.memory_space<smem>>
    %62 = vector.broadcast %61 : f32 to vector<8x128xf32>
    %63 = arith.mulf %62, %5 : vector<8x128xf32>
    %64 = arith.addf %57, %63 : vector<8x128xf32>
    %65 = vector.broadcast %61 : f32 to vector<8x128xf32>
    %66 = arith.mulf %65, %11 : vector<8x128xf32>
    %67 = arith.addf %60, %66 : vector<8x128xf32>
    %68 = vector.broadcast %46 : f32 to vector<8x128xf32>
    %69 = arith.mulf %64, %68 : vector<8x128xf32>
    %70 = vector.broadcast %47 : f32 to vector<8x128xf32>
    %71 = arith.addf %69, %70 : vector<8x128xf32>
    %72 = vector.broadcast %46 : f32 to vector<8x128xf32>
    %73 = arith.mulf %67, %72 : vector<8x128xf32>
    %74 = vector.broadcast %47 : f32 to vector<8x128xf32>
    %75 = arith.addf %73, %74 : vector<8x128xf32>
    %76 = arith.maximumf %71, %75 : vector<8x128xf32>
    %c1_44 = arith.constant 1 : index
    %c0_45 = arith.constant 0 : index
    %c0_46 = arith.constant 0 : index
    %77 = vector.load %arg5[%c1_44, %c0_45, %c0_46] : memref<3x8x128xf32, #tpu.memory_space<vmem>>, vector<1x8x128xf32>
    %78 = vector.shape_cast %77 : vector<1x8x128xf32> to vector<8x128xf32>
    %79 = vector.shape_cast %76 : vector<8x128xf32> to vector<1x8x128xf32>
    tpu.vector_store %arg5[%c1_44, %c0_45, %c0_46], %79 {strides = array<i32>} : memref<3x8x128xf32, #tpu.memory_space<vmem>>, vector<1x8x128xf32>,
    %c2_47 = arith.constant 2 : index
    %80 = memref.load %arg2[%c2_47] : memref<3xf32, #tpu.memory_space<smem>>
    %c2_48 = arith.constant 2 : index
    %81 = memref.load %arg3[%c2_48] : memref<3xf32, #tpu.memory_space<smem>>
    %c2_49 = arith.constant 2 : index
    %c0_50 = arith.constant 0 : index
    %82 = memref.load %arg1[%c2_49, %c0_50] : memref<3x3xf32, #tpu.memory_space<smem>>
    %83 = vector.broadcast %82 : f32 to vector<8x128xf32>
    %84 = arith.mulf %83, %1 : vector<8x128xf32>
    %c2_51 = arith.constant 2 : index
    %c0_52 = arith.constant 0 : index
    %85 = memref.load %arg1[%c2_51, %c0_52] : memref<3x3xf32, #tpu.memory_space<smem>>
    %86 = vector.broadcast %85 : f32 to vector<8x128xf32>
    %87 = arith.mulf %86, %7 : vector<8x128xf32>
    %c2_53 = arith.constant 2 : index
    %c1_54 = arith.constant 1 : index
    %88 = memref.load %arg1[%c2_53, %c1_54] : memref<3x3xf32, #tpu.memory_space<smem>>
    %89 = vector.broadcast %88 : f32 to vector<8x128xf32>
    %90 = arith.mulf %89, %3 : vector<8x128xf32>
    %91 = arith.addf %84, %90 : vector<8x128xf32>
    %92 = vector.broadcast %88 : f32 to vector<8x128xf32>
    %93 = arith.mulf %92, %9 : vector<8x128xf32>
    %94 = arith.addf %87, %93 : vector<8x128xf32>
    %c2_55 = arith.constant 2 : index
    %c2_56 = arith.constant 2 : index
    %95 = memref.load %arg1[%c2_55, %c2_56] : memref<3x3xf32, #tpu.memory_space<smem>>
    %96 = vector.broadcast %95 : f32 to vector<8x128xf32>
    %97 = arith.mulf %96, %5 : vector<8x128xf32>
    %98 = arith.addf %91, %97 : vector<8x128xf32>
    %99 = vector.broadcast %95 : f32 to vector<8x128xf32>
    %100 = arith.mulf %99, %11 : vector<8x128xf32>
    %101 = arith.addf %94, %100 : vector<8x128xf32>
    %102 = vector.broadcast %80 : f32 to vector<8x128xf32>
    %103 = arith.mulf %98, %102 : vector<8x128xf32>
    %104 = vector.broadcast %81 : f32 to vector<8x128xf32>
    %105 = arith.addf %103, %104 : vector<8x128xf32>
    %106 = vector.broadcast %80 : f32 to vector<8x128xf32>
    %107 = arith.mulf %101, %106 : vector<8x128xf32>
    %108 = vector.broadcast %81 : f32 to vector<8x128xf32>
    %109 = arith.addf %107, %108 : vector<8x128xf32>
    %110 = arith.maximumf %105, %109 : vector<8x128xf32>
    %c2_57 = arith.constant 2 : index
    %c0_58 = arith.constant 0 : index
    %c0_59 = arith.constant 0 : index
    %111 = vector.load %arg5[%c2_57, %c0_58, %c0_59] : memref<3x8x128xf32, #tpu.memory_space<vmem>>, vector<1x8x128xf32>
    %112 = vector.shape_cast %111 : vector<1x8x128xf32> to vector<8x128xf32>
    %113 = vector.shape_cast %110 : vector<8x128xf32> to vector<1x8x128xf32>
    tpu.vector_store %arg5[%c2_57, %c0_58, %c0_59], %113 {strides = array<i32>} : memref<3x8x128xf32, #tpu.memory_space<vmem>>, vector<1x8x128xf32>,
    return
  }
  func.func @transform_0(%arg0: i32) -> (i32, i32) {
    %c0_i32 = arith.constant 0 : i32
    %c0_i32_0 = arith.constant 0 : i32
    %c0_i32_1 = arith.constant 0 : i32
    return %c0_i32, %c0_i32_0 : i32, i32
  }
  func.func @transform_1(%arg0: i32) -> i32 {
    %c0_i32 = arith.constant 0 : i32
    %c0_i32_0 = arith.constant 0 : i32
    return %c0_i32 : i32
  }
  func.func @transform_2(%arg0: i32) -> i32 {
    %c0_i32 = arith.constant 0 : i32
    %c0_i32_0 = arith.constant 0 : i32
    return %c0_i32 : i32
  }
  func.func @transform_3(%arg0: i32) -> (i32, i32, i32, i32) {
    %c0_i32 = arith.constant 0 : i32
    %c0_i32_0 = arith.constant 0 : i32
    %c0_i32_1 = arith.constant 0 : i32
    %c0_i32_2 = arith.constant 0 : i32
    return %c0_i32, %c0_i32_0, %arg0, %c0_i32_1 : i32, i32, i32, i32
  }
  func.func @transform_4(%arg0: i32) -> (i32, i32, i32) {
    %c0_i32 = arith.constant 0 : i32
    %c0_i32_0 = arith.constant 0 : i32
    %c0_i32_1 = arith.constant 0 : i32
    return %c0_i32, %arg0, %c0_i32_0 : i32, i32, i32
  }
}

</mosaic_0001>

<llo_original>
// kernel: conv_bn_pool.2
$region0: #{conv_bn_pool.2}
  #allocation0 [shape = 'u32[]', space=smem, size = 0x4, offset = 0x4, fixed_abs, tag = 'smem constant byte address 0x4 - core index']
  #allocation1 [shape = 'u32[72,128]{1,0:T(1,128)}', space=vmem, size = 0x9000, scoped, tag = 'internal scratch']
  %s0 = inlined_call_operand.vmem [shape: f32[2,3,16,128], index: 0, kind: input, shape index: {}]
  %s1 = inlined_call_operand.vmem [shape: f32[2,9,8,128], index: 1, kind: output, shape index: {}]
  %s2 = sld [smem:[#allocation0]]
  $region79: #{conv_bn_pool.2} parent=0
    _
  %s4 = ssub.s32 1, %s2
  %s5 = scalar_select 0, %s4, %s2
  $region1: #{conv_bn_pool.2} parent=0
    #allocation2 [shape = 'u8[49152]{0}', space=vmem, size = 0xc000, scoped, tag = 'input window, operand 0']
    loop: start=0, step=1, limit=4
    $region2: #{conv_bn_pool.2} parent=1 // loop_pre_header
      _
    $region3: #{conv_bn_pool.2} parent=1 // loop_header
      %s7 = sphi 0, %s11
      %p8 = scmp.ge.s32.totalorder %s7, 4
      %s14 = sphi 0, %s26
      %s15 = sphi 0, %s22
      %s16 = sphi 0, %s14
      %s17 = sphi 0, %s15
      %s18 = sphi 0, %s16
      %s19 = sphi 0, %s17
      %s31 = sphi 0, %s33
      %s34 = sphi 0, %s31
      %s35 = sphi 0, %s34
      %s51 = sphi 0, %s35
      %s57 = sphi 0, %s59
      %s60 = sphi 0, %s57
      %s61 = sphi 0, %s60
      %s77 = sphi 0, %s61
    $region4: #{conv_bn_pool.2} parent=1 // loop_header_branch
      %10 = sbr.rel (%p8) target = $region8
    $region5: #{conv_bn_pool.2} parent=1 // loop_body
      %s12 = ssub.s32 %s7, 1
      %s13 = ssub.s32 %s7, 2
      %s20 = sadd.s32 1, %s15
      %p21 = scmp.ge.s32.totalorder %s20, 1
      %s22 = scalar_select %p21, 0, %s20
      %s23 = sadd.s32 1, %s14
      %s24 = scalar_select %p21, %s23, %s14
      %p25 = scmp.ge.s32.totalorder %s24, 2
      %s26 = scalar_select %p25, 0, %s24
      %s27 = sadd.s32 %s14, %s15
      %s28 = sadd.s32 %s26, %s22
      %s29 = ssub.s32 %s27, %s28
      %p30 = scmp.eq.s32.totalorder %s29, 0
      %s32 = sadd.s32 %s31, 1
      %s33 = scalar_select %p30, %s31, %s32
      %p36 = pneg %p30
      %p37 = scmp.eq.s32.totalorder %s7, 1
      %p38 = por %p36, %p37
      %p39 = scmp.ne.s32.totalorder %s31, %s34
      %p40 = scmp.eq.s32.totalorder %s7, 0
      %p41 = por %p39, %p40
      %p42 = scmp.ne.s32.totalorder %s31, %s34
      %p43 = scmp.eq.s32.totalorder %s12, 1
      %p44 = por %p42, %p43
      %p45 = scmp.ne.s32.totalorder %s34, %s35
      %p46 = scmp.eq.s32.totalorder %s12, 0
      %p47 = por %p45, %p46
      %p48 = scmp.ne.s32.totalorder %s34, %s35
      %p49 = scmp.eq.s32.totalorder %s13, 1
      %p50 = por %p48, %p49
      %p52 = scmp.ne.s32.totalorder %s35, %s51
      %p53 = scmp.eq.s32.totalorder %s13, 0
      %p54 = por %p52, %p53
      %s55 = ssub.s32 %s14, %s26
      %p56 = scmp.eq.s32.totalorder %s55, 0
      %s58 = sadd.s32 %s57, 1
      %s59 = scalar_select %p56, %s57, %s58
      %p62 = pneg %p56
      %p63 = scmp.eq.s32.totalorder %s7, 1
      %p64 = por %p62, %p63
      %p65 = scmp.ne.s32.totalorder %s57, %s60
      %p66 = scmp.eq.s32.totalorder %s7, 0
      %p67 = por %p65, %p66
      %p68 = scmp.ne.s32.totalorder %s57, %s60
      %p69 = scmp.eq.s32.totalorder %s12, 1
      %p70 = por %p68, %p69
      %p71 = scmp.ne.s32.totalorder %s60, %s61
      %p72 = scmp.eq.s32.totalorder %s12, 0
      %p73 = por %p71, %p72
      %p74 = scmp.ne.s32.totalorder %s60, %s61
      %p75 = scmp.eq.s32.totalorder %s13, 1
      %p76 = por %p74, %p75
      %p78 = scmp.ne.s32.totalorder %s61, %s77
      %p79 = scmp.eq.s32.totalorder %s13, 0
      %p80 = por %p78, %p79
      %p81 = scmp.le.s32.totalorder 1, %s7
      %p82 = scmp.lt.s32.totalorder %s7, 3
      %p83 = pnand %p81, %p82
      %p84 = pneg %p83
      // Predicated region
      $region9: #{conv_bn_pool.2} parent=5 // pred_check
        _
      $region10: #{conv_bn_pool.2} parent=5 // pred_check_branch
        %86 = sbr.rel (%p83) target = $region12
      $region11: #{conv_bn_pool.2} parent=5 // pred_region
        %s87 = ssub.s32 %s7, 1
      $region12: #{conv_bn_pool.2} parent=5 // pred_fallthru
        _
      %p88 = scmp.lt.s32.totalorder %s7, 2
      // Predicated region
      $region13: #{conv_bn_pool.2} parent=5 // pred_check
        %p89 = pneg %p88
      $region14: #{conv_bn_pool.2} parent=5 // pred_check_branch
        %91 = sbr.rel (%p89) target = $region16
      $region15: #{conv_bn_pool.2} parent=5 // pred_region
        // Predicated region
        $region17: #{conv_bn_pool.2} parent=15 // pred_check
          %p92 = pneg %p41
        $region18: #{conv_bn_pool.2} parent=15 // pred_check_branch
          %94 = sbr.rel (%p92) target = $region20
        $region19: #{conv_bn_pool.2} parent=15 // pred_region
          %s95 = sand.u32 %s31, 1
          %s96 = sand.u32 %s31, 1
          %s97 = smul.addr %s96, 48
          %s98 = scalar_lea.vmem [#allocation2], %s97
          %s99 = sadd.s32 %s14, %s15
          %s100 = smul.addr %s99, 8
          %s101 = scalar_lea.vmem %s0, %s100
          // Predicated region
          $region21: #{conv_bn_pool.2} parent=19 // pred_check
            _
          $region22: #{conv_bn_pool.2} parent=19 // pred_check_branch
            %103 = sbr.rel (0) target = $region24
          $region23: #{conv_bn_pool.2} parent=19 // pred_region
            // Predicated region
            $region25: #{conv_bn_pool.2} parent=23 // pred_check
              _
            $region26: #{conv_bn_pool.2} parent=23 // pred_check_branch
              %105 = sbr.rel (0) target = $region28
            $region27: #{conv_bn_pool.2} parent=23 // pred_region
              // Predicated region
              $region40: #{conv_bn_pool.2} parent=27 // pred_check
                _
              $region41: #{conv_bn_pool.2} parent=27 // pred_check_branch
                %131 = sbr.rel (0) target = $region43
              $region42: #{conv_bn_pool.2} parent=27 // pred_region
                loop: start=0, step=1, limit=1
                $region44: #{conv_bn_pool.2} parent=42 // loop_pre_header
                  _
                $region45: #{conv_bn_pool.2} parent=42 // loop_header
                  %s133 = sphi 0, %s137
                  %p134 = scmp.ge.s32.totalorder %s133, 1
                  %s138 = sphi %s101, %s101
                  %s139 = sphi %s98, %s98
                $region46: #{conv_bn_pool.2} parent=42 // loop_header_branch
                  %136 = sbr.rel (%p134) target = $region50
                $region47: #{conv_bn_pool.2} parent=42 // loop_body
                  %v140 = vld [vmem:[%s138] sm:$0xff]
                  %141 = vst [vmem:[%s139] sm:$0xff] %v140
                  %v142 = vld [vmem:[%s138 + $0x10] sm:$0xff]
                  %143 = vst [vmem:[%s139 + $0x8] sm:$0xff] %v142
                  %v144 = vld [vmem:[%s138 + $0x20] sm:$0xff]
                  %145 = vst [vmem:[%s139 + $0x10] sm:$0xff] %v144
                  %v146 = vld [vmem:[%s138 + $0x30] sm:$0xff]
                  %147 = vst [vmem:[%s139 + $0x18] sm:$0xff] %v146
                  %v148 = vld [vmem:[%s138 + $0x40] sm:$0xff]
                  %149 = vst [vmem:[%s139 + $0x20] sm:$0xff] %v148
                  %v150 = vld [vmem:[%s138 + $0x50] sm:$0xff]
                  %151 = vst [vmem:[%s139 + $0x28] sm:$0xff] %v150
                $region48: #{conv_bn_pool.2} parent=42 // loop_footer
                  %s137 = sadd.s32 1, %s133
                $region49: #{conv_bn_pool.2} parent=42 // loop_footer_branch
                  %132 = sbr.rel target = $region45
                $region50: #{conv_bn_pool.2} parent=42 // loop_exit
                  _
              $region43: #{conv_bn_pool.2} parent=27 // pred_fallthru
                _
              // Predicated region
              $region51: #{conv_bn_pool.2} parent=27 // pred_check
                _
              $region52: #{conv_bn_pool.2} parent=27 // pred_check_branch
                %153 = sbr.rel target = $region54
              $region53: #{conv_bn_pool.2} parent=27 // pred_region
                _
              $region54: #{conv_bn_pool.2} parent=27 // pred_fallthru
                _
            $region28: #{conv_bn_pool.2} parent=23 // pred_fallthru
              _
            // Predicated region
            $region29: #{conv_bn_pool.2} parent=23 // pred_check
              _
            $region30: #{conv_bn_pool.2} parent=23 // pred_check_branch
              %107 = sbr.rel target = $region32
            $region31: #{conv_bn_pool.2} parent=23 // pred_region
              %s109 = ssub.s32 256, 1
              loop: start=0, step=1, limit=1
              $region33: #{conv_bn_pool.2} parent=31 // loop_pre_header
                _
              $region34: #{conv_bn_pool.2} parent=31 // loop_header
                %s111 = sphi 0, %s115
                %p112 = scmp.ge.s32.totalorder %s111, 1
                %s116 = sphi %s101, %s101
                %s117 = sphi %s98, %s98
              $region35: #{conv_bn_pool.2} parent=31 // loop_header_branch
                %114 = sbr.rel (%p112) target = $region39
              $region36: #{conv_bn_pool.2} parent=31 // loop_body
                %v118 = vld [vmem:[%s116] sm:%s109]
                %119 = vst [vmem:[%s117] sm:%s109] %v118
                %v120 = vld [vmem:[%s116 + $0x10] sm:%s109]
                %121 = vst [vmem:[%s117 + $0x8] sm:%s109] %v120
                %v122 = vld [vmem:[%s116 + $0x20] sm:%s109]
                %123 = vst [vmem:[%s117 + $0x10] sm:%s109] %v122
                %v124 = vld [vmem:[%s116 + $0x30] sm:%s109]
                %125 = vst [vmem:[%s117 + $0x18] sm:%s109] %v124
                %v126 = vld [vmem:[%s116 + $0x40] sm:%s109]
                %127 = vst [vmem:[%s117 + $0x20] sm:%s109] %v126
                %v128 = vld [vmem:[%s116 + $0x50] sm:%s109]
                %129 = vst [vmem:[%s117 + $0x28] sm:%s109] %v128
              $region37: #{conv_bn_pool.2} parent=31 // loop_footer
                %s115 = sadd.s32 1, %s111
              $region38: #{conv_bn_pool.2} parent=31 // loop_footer_branch
                %110 = sbr.rel target = $region34
              $region39: #{conv_bn_pool.2} parent=31 // loop_exit
                _
            $region32: #{conv_bn_pool.2} parent=23 // pred_fallthru
              _
          $region24: #{conv_bn_pool.2} parent=19 // pred_fallthru
            _
          %154 = vnop
        $region20: #{conv_bn_pool.2} parent=15 // pred_fallthru
          _
      $region16: #{conv_bn_pool.2} parent=5 // pred_fallthru
        _
      %p155 = scmp.le.s32.totalorder 1, %s7
      %p156 = scmp.lt.s32.totalorder %s7, 3
      %p157 = pnand %p155, %p156
      %p158 = pneg %p157
      // Predicated region
      $region55: #{conv_bn_pool.2} parent=5 // pred_check
        _
      $region56: #{conv_bn_pool.2} parent=5 // pred_check_branch
        %160 = sbr.rel (%p157) target = $region58
      $region57: #{conv_bn_pool.2} parent=5 // pred_region
        %s161 = ssub.s32 %s7, 1
        %s162 = sand.u32 %s34, 1
        %s163 = sand.u32 %s34, 1
        %s164 = smul.addr %s163, 48
        %s165 = scalar_lea.vmem [#allocation2], %s164
        // Predicated region
        $region59: #{conv_bn_pool.2} parent=57 // pred_check
          %p166 = pneg %p47
        $region60: #{conv_bn_pool.2} parent=57 // pred_check_branch
          %168 = sbr.rel (%p166) target = $region62
        $region61: #{conv_bn_pool.2} parent=57 // pred_region
          _
        $region62: #{conv_bn_pool.2} parent=57 // pred_fallthru
          _
        %s169 = sand.u32 %s34, 1
        %s170 = sand.u32 %s34, 1
        %s171 = smul.addr %s170, 48
        %s172 = scalar_lea.vmem [#allocation2], %s171
        %p173 = pneg %p47
        %p174 = pneg %p44
        %p175 = pneg %p73
        %p176 = pneg %p70
        %p177 = scmp.lt.s32.totalorder %s16, 1
        %s178 = scalar_select %p177, %s16, 1
        %s179 = smul.addr %s178, 9
        %s180 = smul.addr %s179, 8
        %s181 = scalar_lea.vmem %s1, %s180
        %s182 = sadd.s32 %s16, %s17
        %p183 = scmp.lt.s32.totalorder %s16, 1
        %s184 = scalar_select %p183, %s16, 1
        %s185 = smul.addr %s184, 9
        %s186 = smul.addr %s185, 8
        %s187 = scalar_lea.vmem %s1, %s186
        %p188 = scmp.eq.s32.totalorder %s17, 0
        // Predicated region
        $region63: #{conv_bn_pool.2} parent=57 // pred_check
          %p189 = pneg %p188
        $region64: #{conv_bn_pool.2} parent=57 // pred_check_branch
          %191 = sbr.rel (%p189) target = $region66
        $region65: #{conv_bn_pool.2} parent=57 // pred_region
          %192 = vst [vmem:[%s187] sm:$0xff] 0.0
          %193 = vst [vmem:[%s187 + $0x8] sm:$0xff] 0.0
          %194 = vst [vmem:[%s187 + $0x10] sm:$0xff] 0.0
          %195 = vst [vmem:[%s187 + $0x18] sm:$0xff] 0.0
          %196 = vst [vmem:[%s187 + $0x20] sm:$0xff] 0.0
          %197 = vst [vmem:[%s187 + $0x28] sm:$0xff] 0.0
          %198 = vst [vmem:[%s187 + $0x30] sm:$0xff] 0.0
          %199 = vst [vmem:[%s187 + $0x38] sm:$0xff] 0.0
          %200 = vst [vmem:[%s187 + $0x40] sm:$0xff] 0.0
        $region66: #{conv_bn_pool.2} parent=57 // pred_fallthru
          _
        %v201 = vld [vmem:[%s165] sm:$0xff]
        %s202 = scalar_lea.vmem %s165, 8 [#allocation2]
        %v203 = vld [vmem:[%s202] sm:$0xff]
        %s204 = scalar_lea.vmem %s165, 16 [#allocation2]
        %v205 = vld [vmem:[%s204] sm:$0xff]
        %s206 = scalar_lea.vmem %s165, 24 [#allocation2]
        %v207 = vld [vmem:[%s206] sm:$0xff]
        %s208 = scalar_lea.vmem %s165, 32 [#allocation2]
        %v209 = vld [vmem:[%s208] sm:$0xff]
        %s210 = scalar_lea.vmem %s165, 40 [#allocation2]
        %v211 = vld [vmem:[%s210] sm:$0xff]
        %v212 = vld [vmem:[%s187] sm:$0xff]
        %v213 = vadd.f32 %v201, %v207
        %v214 = vadd.f32 %v213, 0.0
        %v215 = vadd.f32 %v212, %v214
        %216 = vst [vmem:[%s187] sm:$0xff] %v215
        %s217 = scalar_lea.vmem %s187, 8
        %v218 = vld [vmem:[%s217] sm:$0xff]
        %v219 = vadd.f32 %v203, %v209
        %v220 = vadd.f32 %v219, 0.0
        %v221 = vadd.f32 %v218, %v220
        %222 = vst [vmem:[%s217] sm:$0xff] %v221
        %s223 = scalar_lea.vmem %s187, 16
        %v224 = vld [vmem:[%s223] sm:$0xff]
        %v225 = vadd.f32 %v205, %v211
        %v226 = vadd.f32 %v225, 0.0
        %v227 = vadd.f32 %v224, %v226
        %228 = vst [vmem:[%s223] sm:$0xff] %v227
        %s229 = scalar_lea.vmem %s187, 24
        %v230 = vld [vmem:[%s229] sm:$0xff]
        %v231 = vmul.f32 %v201, %v201
        %v232 = vmul.f32 %v207, %v207
        %v233 = vadd.f32 %v231, %v232
        %v234 = vadd.f32 %v233, 0.0
        %v235 = vadd.f32 %v230, %v234
        %236 = vst [vmem:[%s229] sm:$0xff] %v235
        %s237 = scalar_lea.vmem %s187, 32
        %v238 = vld [vmem:[%s237] sm:$0xff]
        %v239 = vmul.f32 %v201, %v203
        %v240 = vmul.f32 %v207, %v209
        %v241 = vadd.f32 %v239, %v240
        %v242 = vadd.f32 %v241, 0.0
        %v243 = vadd.f32 %v238, %v242
        %244 = vst [vmem:[%s237] sm:$0xff] %v243
        %s245 = scalar_lea.vmem %s187, 40
        %v246 = vld [vmem:[%s245] sm:$0xff]
        %v247 = vmul.f32 %v201, %v205
        %v248 = vmul.f32 %v207, %v211
        %v249 = vadd.f32 %v247, %v248
        %v250 = vadd.f32 %v249, 0.0
        %v251 = vadd.f32 %v246, %v250
        %252 = vst [vmem:[%s245] sm:$0xff] %v251
        %s253 = scalar_lea.vmem %s187, 48
        %v254 = vld [vmem:[%s253] sm:$0xff]
        %v255 = vmul.f32 %v203, %v203
        %v256 = vmul.f32 %v209, %v209
        %v257 = vadd.f32 %v255, %v256
        %v258 = vadd.f32 %v257, 0.0
        %v259 = vadd.f32 %v254, %v258
        %260 = vst [vmem:[%s253] sm:$0xff] %v259
        %s261 = scalar_lea.vmem %s187, 56
        %v262 = vld [vmem:[%s261] sm:$0xff]
        %v263 = vmul.f32 %v203, %v205
        %v264 = vmul.f32 %v209, %v211
        %v265 = vadd.f32 %v263, %v264
        %v266 = vadd.f32 %v265, 0.0
        %v267 = vadd.f32 %v262, %v266
        %268 = vst [vmem:[%s261] sm:$0xff] %v267
        %s269 = scalar_lea.vmem %s187, 64
        %v270 = vld [vmem:[%s269] sm:$0xff]
        %v271 = vmul.f32 %v205, %v205
        %v272 = vmul.f32 %v211, %v211
        %v273 = vadd.f32 %v271, %v272
        %v274 = vadd.f32 %v273, 0.0
        %v275 = vadd.f32 %v270, %v274
        %276 = vst [vmem:[%s269] sm:$0xff] %v275
        %p277 = scmp.lt.s32.totalorder %s16, 1
        %s278 = scalar_select %p277, %s16, 1
        %s279 = smul.addr %s278, 9
        %s280 = smul.addr %s279, 8
        %s281 = scalar_lea.vmem %s1, %s280
        // Predicated region
        $region67: #{conv_bn_pool.2} parent=57 // pred_check
          %p282 = pneg %p70
        $region68: #{conv_bn_pool.2} parent=57 // pred_check_branch
          %284 = sbr.rel (%p282) target = $region70
        $region69: #{conv_bn_pool.2} parent=57 // pred_region
          _
        $region70: #{conv_bn_pool.2} parent=57 // pred_fallthru
          _
      $region58: #{conv_bn_pool.2} parent=5 // pred_fallthru
        _
      %p285 = scmp.le.s32.totalorder 2, %s7
      // Predicated region
      $region71: #{conv_bn_pool.2} parent=5 // pred_check
        %p286 = pneg %p285
      $region72: #{conv_bn_pool.2} parent=5 // pred_check_branch
        %288 = sbr.rel (%p286) target = $region74
      $region73: #{conv_bn_pool.2} parent=5 // pred_region
        %s289 = ssub.s32 %s7, 2
        // Predicated region
        $region75: #{conv_bn_pool.2} parent=73 // pred_check
          %p290 = pneg %p76
        $region76: #{conv_bn_pool.2} parent=73 // pred_check_branch
          %292 = sbr.rel (%p290) target = $region78
        $region77: #{conv_bn_pool.2} parent=73 // pred_region
          %p293 = scmp.lt.s32.totalorder %s18, 1
          %s294 = scalar_select %p293, %s18, 1
          %s295 = smul.addr %s294, 9
          %s296 = smul.addr %s295, 8
          %s297 = scalar_lea.vmem %s1, %s296
        $region78: #{conv_bn_pool.2} parent=73 // pred_fallthru
          _
      $region74: #{conv_bn_pool.2} parent=5 // pred_fallthru
        _
    $region6: #{conv_bn_pool.2} parent=1 // loop_footer
      %s11 = sadd.s32 1, %s7
    $region7: #{conv_bn_pool.2} parent=1 // loop_footer_branch
      %6 = sbr.rel target = $region3
    $region8: #{conv_bn_pool.2} parent=1 // loop_exit
      _

// kernel: conv_bn_pool.3
$region0: #{conv_bn_pool.3}
  #allocation0 [shape = 'u32[]', space=smem, size = 0x4, offset = 0x4, fixed_abs, tag = 'smem constant byte address 0x4 - core index']
  #allocation1 [shape = 'u32[72,128]{1,0:T(1,128)}', space=vmem, size = 0x9000, scoped, tag = 'internal scratch']
  %s0 = inlined_call_operand.vmem [shape: f32[3,3], index: 0, kind: input, shape index: {}]
  %s1 = inlined_call_operand.vmem [shape: f32[3], index: 1, kind: input, shape index: {}]
  %s2 = inlined_call_operand.vmem [shape: f32[3], index: 2, kind: input, shape index: {}]
  %s3 = inlined_call_operand.vmem [shape: f32[2,3,16,128], index: 3, kind: input, shape index: {}]
  %s4 = inlined_call_operand.vmem [shape: f32[3,16,128], index: 4, kind: output, shape index: {}]
  %s5 = sld [smem:[#allocation0]]
  $region133: #{conv_bn_pool.3} parent=0
    _
  %s7 = ssub.s32 1, %s5
  %s8 = scalar_select 0, %s7, %s5
  $region1: #{conv_bn_pool.3} parent=0
    #allocation2 [shape = 'u8[2048]{0}', space=smem, size = 0x800, scoped, tag = 'input window, operand 0, single buffered']
    #allocation3 [shape = 's32[2]{0}', space=sflag, size = 0x8, scoped, tag = 'scoped memory for conv_bn_pool.3']
    #allocation4 [shape = 'u8[512]{0}', space=smem, size = 0x200, scoped, tag = 'input window, operand 1, single buffered']
    #allocation5 [shape = 's32[1]{0}', space=sflag, size = 0x4, scoped, tag = 'scoped memory for conv_bn_pool.3']
    #allocation6 [shape = 'u8[512]{0}', space=smem, size = 0x200, scoped, tag = 'input window, operand 2, single buffered']
    #allocation7 [shape = 'u8[49152]{0}', space=vmem, size = 0xc000, scoped, tag = 'input window, operand 3']
    #allocation8 [shape = 'u8[24576]{0}', space=vmem, size = 0x6000, scoped, tag = 'output window, operand 0']
    %9 = vsyncpa [#allocation3], 0
    %10 = vsyncpa [#allocation5], 0
    loop: start=0, step=1, limit=4
    $region2: #{conv_bn_pool.3} parent=1 // loop_pre_header
      _
    $region3: #{conv_bn_pool.3} parent=1 // loop_header
      %s12 = sphi 0, %s16
      %p13 = scmp.ge.s32.totalorder %s12, 4
      %s20 = sphi 0, %s20
      %s22 = sphi 0, %s20
      %s23 = sphi 0, %s22
      %s37 = sphi 0, %s23
      %s41 = sphi 0, %s41
      %s43 = sphi 0, %s41
      %s44 = sphi 0, %s43
      %s58 = sphi 0, %s44
      %s62 = sphi 0, %s62
      %s64 = sphi 0, %s62
      %s65 = sphi 0, %s64
      %s79 = sphi 0, %s65
      %s85 = sphi 0, %s87
      %s88 = sphi 0, %s85
      %s89 = sphi 0, %s88
      %s105 = sphi 0, %s89
      %s111 = sphi 0, %s113
      %s114 = sphi 0, %s111
      %s115 = sphi 0, %s114
      %s131 = sphi 0, %s115
    $region4: #{conv_bn_pool.3} parent=1 // loop_header_branch
      %15 = sbr.rel (%p13) target = $region8
    $region5: #{conv_bn_pool.3} parent=1 // loop_body
      %s17 = ssub.s32 %s12, 1
      %s18 = ssub.s32 %s12, 2
      %s19 = sadd.s32 %s12, 1
      %s21 = sadd.s32 %s20, 1
      %p24 = scmp.eq.s32.totalorder %s12, 1
      %p25 = scmp.ne.s32.totalorder %s20, %s22
      %p26 = scmp.eq.s32.totalorder %s12, 0
      %p27 = por %p25, %p26
      %p28 = scmp.ne.s32.totalorder %s20, %s22
      %p29 = scmp.eq.s32.totalorder %s17, 1
      %p30 = por %p28, %p29
      %p31 = scmp.ne.s32.totalorder %s22, %s23
      %p32 = scmp.eq.s32.totalorder %s17, 0
      %p33 = por %p31, %p32
      %p34 = scmp.ne.s32.totalorder %s22, %s23
      %p35 = scmp.eq.s32.totalorder %s18, 1
      %p36 = por %p34, %p35
      %p38 = scmp.ne.s32.totalorder %s23, %s37
      %p39 = scmp.eq.s32.totalorder %s18, 0
      %p40 = por %p38, %p39
      %s42 = sadd.s32 %s41, 1
      %p45 = scmp.eq.s32.totalorder %s12, 1
      %p46 = scmp.ne.s32.totalorder %s41, %s43
      %p47 = scmp.eq.s32.totalorder %s12, 0
      %p48 = por %p46, %p47
      %p49 = scmp.ne.s32.totalorder %s41, %s43
      %p50 = scmp.eq.s32.totalorder %s17, 1
      %p51 = por %p49, %p50
      %p52 = scmp.ne.s32.totalorder %s43, %s44
      %p53 = scmp.eq.s32.totalorder %s17, 0
      %p54 = por %p52, %p53
      %p55 = scmp.ne.s32.totalorder %s43, %s44
      %p56 = scmp.eq.s32.totalorder %s18, 1
      %p57 = por %p55, %p56
      %p59 = scmp.ne.s32.totalorder %s44, %s58
      %p60 = scmp.eq.s32.totalorder %s18, 0
      %p61 = por %p59, %p60
      %s63 = sadd.s32 %s62, 1
      %p66 = scmp.eq.s32.totalorder %s12, 1
      %p67 = scmp.ne.s32.totalorder %s62, %s64
      %p68 = scmp.eq.s32.totalorder %s12, 0
      %p69 = por %p67, %p68
      %p70 = scmp.ne.s32.totalorder %s62, %s64
      %p71 = scmp.eq.s32.totalorder %s17, 1
      %p72 = por %p70, %p71
      %p73 = scmp.ne.s32.totalorder %s64, %s65
      %p74 = scmp.eq.s32.totalorder %s17, 0
      %p75 = por %p73, %p74
      %p76 = scmp.ne.s32.totalorder %s64, %s65
      %p77 = scmp.eq.s32.totalorder %s18, 1
      %p78 = por %p76, %p77
      %p80 = scmp.ne.s32.totalorder %s65, %s79
      %p81 = scmp.eq.s32.totalorder %s18, 0
      %p82 = por %p80, %p81
      %s83 = ssub.s32 %s12, %s19
      %p84 = scmp.eq.s32.totalorder %s83, 0
      %s86 = sadd.s32 %s85, 1
      %s87 = scalar_select %p84, %s85, %s86
      %p90 = pneg %p84
      %p91 = scmp.eq.s32.totalorder %s12, 1
      %p92 = por %p90, %p91
      %p93 = scmp.ne.s32.totalorder %s85, %s88
      %p94 = scmp.eq.s32.totalorder %s12, 0
      %p95 = por %p93, %p94
      %p96 = scmp.ne.s32.totalorder %s85, %s88
      %p97 = scmp.eq.s32.totalorder %s17, 1
      %p98 = por %p96, %p97
      %p99 = scmp.ne.s32.totalorder %s88, %s89
      %p100 = scmp.eq.s32.totalorder %s17, 0
      %p101 = por %p99, %p100
      %p102 = scmp.ne.s32.totalorder %s88, %s89
      %p103 = scmp.eq.s32.totalorder %s18, 1
      %p104 = por %p102, %p103
      %p106 = scmp.ne.s32.totalorder %s89, %s105
      %p107 = scmp.eq.s32.totalorder %s18, 0
      %p108 = por %p106, %p107
      %s109 = ssub.s32 %s12, %s19
      %p110 = scmp.eq.s32.totalorder %s109, 0
      %s112 = sadd.s32 %s111, 1
      %s113 = scalar_select %p110, %s111, %s112
      %p116 = pneg %p110
      %p117 = scmp.eq.s32.totalorder %s12, 1
      %p118 = por %p116, %p117
      %p119 = scmp.ne.s32.totalorder %s111, %s114
      %p120 = scmp.eq.s32.totalorder %s12, 0
      %p121 = por %p119, %p120
      %p122 = scmp.ne.s32.totalorder %s111, %s114
      %p123 = scmp.eq.s32.totalorder %s17, 1
      %p124 = por %p122, %p123
      %p125 = scmp.ne.s32.totalorder %s114, %s115
      %p126 = scmp.eq.s32.totalorder %s17, 0
      %p127 = por %p125, %p126
      %p128 = scmp.ne.s32.totalorder %s114, %s115
      %p129 = scmp.eq.s32.totalorder %s18, 1
      %p130 = por %p128, %p129
      %p132 = scmp.ne.s32.totalorder %s115, %s131
      %p133 = scmp.eq.s32.totalorder %s18, 0
      %p134 = por %p132, %p133
      %p135 = scmp.le.s32.totalorder 1, %s12
      %p136 = scmp.lt.s32.totalorder %s12, 3
      %p137 = pnand %p135, %p136
      %p138 = pneg %p137
      // Predicated region
      $region9: #{conv_bn_pool.3} parent=5 // pred_check
        _
      $region10: #{conv_bn_pool.3} parent=5 // pred_check_branch
        %140 = sbr.rel (%p137) target = $region12
      $region11: #{conv_bn_pool.3} parent=5 // pred_region
        %s141 = ssub.s32 %s12, 1
        // Predicated region
        $region13: #{conv_bn_pool.3} parent=11 // pred_check
          %p142 = pneg %p33
        $region14: #{conv_bn_pool.3} parent=11 // pred_check_branch
          %144 = sbr.rel (%p142) target = $region16
        $region15: #{conv_bn_pool.3} parent=11 // pred_region
          %146 = vsyncadd [#allocation3], 0
          %s148 = sshll.u32 %s0, 4
          %s149 = int_to_ptr.vmem [resolvable:$true] %s148
          %151 = dma.vmem_to_smem %s149, 64, [#allocation2], [#allocation3]
        $region16: #{conv_bn_pool.3} parent=11 // pred_fallthru
          _
        // Predicated region
        $region17: #{conv_bn_pool.3} parent=11 // pred_check
          %p152 = pneg %p54
        $region18: #{conv_bn_pool.3} parent=11 // pred_check_branch
          %154 = sbr.rel (%p152) target = $region20
        $region19: #{conv_bn_pool.3} parent=11 // pred_region
          %156 = vsyncadd [#allocation5], 0
          %s158 = sshll.u32 %s1, 4
          %s159 = int_to_ptr.vmem [resolvable:$true] %s158
          %161 = dma.vmem_to_smem %s159, 16, [#allocation4], [#allocation5]
        $region20: #{conv_bn_pool.3} parent=11 // pred_fallthru
          _
        // Predicated region
        $region21: #{conv_bn_pool.3} parent=11 // pred_check
          %p162 = pneg %p75
        $region22: #{conv_bn_pool.3} parent=11 // pred_check_branch
          %164 = sbr.rel (%p162) target = $region24
        $region23: #{conv_bn_pool.3} parent=11 // pred_region
          %166 = vsyncadd [#allocation5], 0
          %s168 = sshll.u32 %s2, 4
          %s169 = int_to_ptr.vmem [resolvable:$true] %s168
          %171 = dma.vmem_to_smem %s169, 16, [#allocation6], [#allocation5]
        $region24: #{conv_bn_pool.3} parent=11 // pred_fallthru
          _
      $region12: #{conv_bn_pool.3} parent=5 // pred_fallthru
        _
      %p172 = scmp.lt.s32.totalorder %s12, 2
      // Predicated region
      $region25: #{conv_bn_pool.3} parent=5 // pred_check
        %p173 = pneg %p172
      $region26: #{conv_bn_pool.3} parent=5 // pred_check_branch
        %175 = sbr.rel (%p173) target = $region28
      $region27: #{conv_bn_pool.3} parent=5 // pred_region
        // Predicated region
        $region29: #{conv_bn_pool.3} parent=27 // pred_check
          %p176 = pneg %p95
        $region30: #{conv_bn_pool.3} parent=27 // pred_check_branch
          %178 = sbr.rel (%p176) target = $region32
        $region31: #{conv_bn_pool.3} parent=27 // pred_region
          %s179 = sand.u32 %s85, 1
          %s180 = sand.u32 %s85, 1
          %s181 = smul.addr %s180, 48
          %s182 = scalar_lea.vmem [#allocation7], %s181
          %s183 = smul.addr %s12, 8
          %s184 = scalar_lea.vmem %s3, %s183
          // Predicated region
          $region33: #{conv_bn_pool.3} parent=31 // pred_check
            _
          $region34: #{conv_bn_pool.3} parent=31 // pred_check_branch
            %186 = sbr.rel (0) target = $region36
          $region35: #{conv_bn_pool.3} parent=31 // pred_region
            // Predicated region
            $region37: #{conv_bn_pool.3} parent=35 // pred_check
              _
            $region38: #{conv_bn_pool.3} parent=35 // pred_check_branch
              %188 = sbr.rel (0) target = $region40
            $region39: #{conv_bn_pool.3} parent=35 // pred_region
              // Predicated region
              $region52: #{conv_bn_pool.3} parent=39 // pred_check
                _
              $region53: #{conv_bn_pool.3} parent=39 // pred_check_branch
                %214 = sbr.rel (0) target = $region55
              $region54: #{conv_bn_pool.3} parent=39 // pred_region
                loop: start=0, step=1, limit=1
                $region56: #{conv_bn_pool.3} parent=54 // loop_pre_header
                  _
                $region57: #{conv_bn_pool.3} parent=54 // loop_header
                  %s216 = sphi 0, %s220
                  %p217 = scmp.ge.s32.totalorder %s216, 1
                  %s221 = sphi %s184, %s184
                  %s222 = sphi %s182, %s182
                $region58: #{conv_bn_pool.3} parent=54 // loop_header_branch
                  %219 = sbr.rel (%p217) target = $region62
                $region59: #{conv_bn_pool.3} parent=54 // loop_body
                  %v223 = vld [vmem:[%s221] sm:$0xff]
                  %224 = vst [vmem:[%s222] sm:$0xff] %v223
                  %v225 = vld [vmem:[%s221 + $0x10] sm:$0xff]
                  %226 = vst [vmem:[%s222 + $0x8] sm:$0xff] %v225
                  %v227 = vld [vmem:[%s221 + $0x20] sm:$0xff]
                  %228 = vst [vmem:[%s222 + $0x10] sm:$0xff] %v227
                  %v229 = vld [vmem:[%s221 + $0x30] sm:$0xff]
                  %230 = vst [vmem:[%s222 + $0x18] sm:$0xff] %v229
                  %v231 = vld [vmem:[%s221 + $0x40] sm:$0xff]
                  %232 = vst [vmem:[%s222 + $0x20] sm:$0xff] %v231
                  %v233 = vld [vmem:[%s221 + $0x50] sm:$0xff]
                  %234 = vst [vmem:[%s222 + $0x28] sm:$0xff] %v233
                $region60: #{conv_bn_pool.3} parent=54 // loop_footer
                  %s220 = sadd.s32 1, %s216
                $region61: #{conv_bn_pool.3} parent=54 // loop_footer_branch
                  %215 = sbr.rel target = $region57
                $region62: #{conv_bn_pool.3} parent=54 // loop_exit
                  _
              $region55: #{conv_bn_pool.3} parent=39 // pred_fallthru
                _
              // Predicated region
              $region63: #{conv_bn_pool.3} parent=39 // pred_check
                _
              $region64: #{conv_bn_pool.3} parent=39 // pred_check_branch
                %236 = sbr.rel target = $region66
              $region65: #{conv_bn_pool.3} parent=39 // pred_region
                _
              $region66: #{conv_bn_pool.3} parent=39 // pred_fallthru
                _
            $region40: #{conv_bn_pool.3} parent=35 // pred_fallthru
              _
            // Predicated region
            $region41: #{conv_bn_pool.3} parent=35 // pred_check
              _
            $region42: #{conv_bn_pool.3} parent=35 // pred_check_branch
              %190 = sbr.rel target = $region44
            $region43: #{conv_bn_pool.3} parent=35 // pred_region
              %s192 = ssub.s32 256, 1
              loop: start=0, step=1, limit=1
              $region45: #{conv_bn_pool.3} parent=43 // loop_pre_header
                _
              $region46: #{conv_bn_pool.3} parent=43 // loop_header
                %s194 = sphi 0, %s198
                %p195 = scmp.ge.s32.totalorder %s194, 1
                %s199 = sphi %s184, %s184
                %s200 = sphi %s182, %s182
              $region47: #{conv_bn_pool.3} parent=43 // loop_header_branch
                %197 = sbr.rel (%p195) target = $region51
              $region48: #{conv_bn_pool.3} parent=43 // loop_body
                %v201 = vld [vmem:[%s199] sm:%s192]
                %202 = vst [vmem:[%s200] sm:%s192] %v201
                %v203 = vld [vmem:[%s199 + $0x10] sm:%s192]
                %204 = vst [vmem:[%s200 + $0x8] sm:%s192] %v203
                %v205 = vld [vmem:[%s199 + $0x20] sm:%s192]
                %206 = vst [vmem:[%s200 + $0x10] sm:%s192] %v205
                %v207 = vld [vmem:[%s199 + $0x30] sm:%s192]
                %208 = vst [vmem:[%s200 + $0x18] sm:%s192] %v207
                %v209 = vld [vmem:[%s199 + $0x40] sm:%s192]
                %210 = vst [vmem:[%s200 + $0x20] sm:%s192] %v209
                %v211 = vld [vmem:[%s199 + $0x50] sm:%s192]
                %212 = vst [vmem:[%s200 + $0x28] sm:%s192] %v211
              $region49: #{conv_bn_pool.3} parent=43 // loop_footer
                %s198 = sadd.s32 1, %s194
              $region50: #{conv_bn_pool.3} parent=43 // loop_footer_branch
                %193 = sbr.rel target = $region46
              $region51: #{conv_bn_pool.3} parent=43 // loop_exit
                _
            $region44: #{conv_bn_pool.3} parent=35 // pred_fallthru
              _
          $region36: #{conv_bn_pool.3} parent=31 // pred_fallthru
            _
          %237 = vnop
        $region32: #{conv_bn_pool.3} parent=27 // pred_fallthru
          _
      $region28: #{conv_bn_pool.3} parent=5 // pred_fallthru
        _
      %p238 = scmp.le.s32.totalorder 1, %s12
      %p239 = scmp.lt.s32.totalorder %s12, 3
      %p240 = pnand %p238, %p239
      %p241 = pneg %p240
      // Predicated region
      $region67: #{conv_bn_pool.3} parent=5 // pred_check
        _
      $region68: #{conv_bn_pool.3} parent=5 // pred_check_branch
        %243 = sbr.rel (%p240) target = $region70
      $region69: #{conv_bn_pool.3} parent=5 // pred_region
        %s244 = ssub.s32 %s12, 1
        // Predicated region
        $region71: #{conv_bn_pool.3} parent=69 // pred_check
          %p245 = pneg %p33
        $region72: #{conv_bn_pool.3} parent=69 // pred_check_branch
          %247 = sbr.rel (%p245) target = $region74
        $region73: #{conv_bn_pool.3} parent=69 // pred_region
          %249 = dma.done [#allocation3], 64
        $region74: #{conv_bn_pool.3} parent=69 // pred_fallthru
          _
        // Predicated region
        $region75: #{conv_bn_pool.3} parent=69 // pred_check
          %p250 = pneg %p54
        $region76: #{conv_bn_pool.3} parent=69 // pred_check_branch
          %252 = sbr.rel (%p250) target = $region78
        $region77: #{conv_bn_pool.3} parent=69 // pred_region
          %254 = dma.done [#allocation5], 16
        $region78: #{conv_bn_pool.3} parent=69 // pred_fallthru
          _
        // Predicated region
        $region79: #{conv_bn_pool.3} parent=69 // pred_check
          %p255 = pneg %p75
        $region80: #{conv_bn_pool.3} parent=69 // pred_check_branch
          %257 = sbr.rel (%p255) target = $region82
        $region81: #{conv_bn_pool.3} parent=69 // pred_region
          %259 = dma.done [#allocation5], 16
        $region82: #{conv_bn_pool.3} parent=69 // pred_fallthru
          _
        %s260 = sand.u32 %s88, 1
        %s261 = sand.u32 %s88, 1
        %s262 = smul.addr %s261, 48
        %s263 = scalar_lea.vmem [#allocation7], %s262
        // Predicated region
        $region83: #{conv_bn_pool.3} parent=69 // pred_check
          %p264 = pneg %p101
        $region84: #{conv_bn_pool.3} parent=69 // pred_check_branch
          %266 = sbr.rel (%p264) target = $region86
        $region85: #{conv_bn_pool.3} parent=69 // pred_region
          _
        $region86: #{conv_bn_pool.3} parent=69 // pred_fallthru
          _
        %267 = sfence
        %p268 = pneg %p33
        %p269 = pneg %p30
        %p270 = pneg %p54
        %p271 = pneg %p51
        %p272 = pneg %p75
        %p273 = pneg %p72
        %s274 = sand.u32 %s88, 1
        %s275 = sand.u32 %s88, 1
        %s276 = smul.addr %s275, 48
        %s277 = scalar_lea.vmem [#allocation7], %s276
        %p278 = pneg %p101
        %p279 = pneg %p98
        %p280 = pneg %p127
        %p281 = pneg %p124
        %s282 = sand.u32 %s114, 1
        %s283 = sand.u32 %s114, 1
        %s284 = smul.addr %s283, 24
        %s285 = scalar_lea.vmem [#allocation8], %s284
        %v286 = vld [vmem:[%s263] sm:$0xff]
        %s287 = scalar_lea.vmem %s263, 8 [#allocation7]
        %v288 = vld [vmem:[%s287] sm:$0xff]
        %s289 = scalar_lea.vmem %s263, 16 [#allocation7]
        %v290 = vld [vmem:[%s289] sm:$0xff]
        %s291 = scalar_lea.vmem %s263, 24 [#allocation7]
        %v292 = vld [vmem:[%s291] sm:$0xff]
        %s293 = scalar_lea.vmem %s263, 32 [#allocation7]
        %v294 = vld [vmem:[%s293] sm:$0xff]
        %s295 = scalar_lea.vmem %s263, 40 [#allocation7]
        %v296 = vld [vmem:[%s295] sm:$0xff]
        %s297 = sld [smem:[#allocation4]]
        %s298 = sld [smem:[#allocation6]]
        %s299 = sld [smem:[#allocation2]]
        %v300 = vstv %s299
        %v301 = vmul.f32 %v300, %v286
        %v302 = vmul.f32 %v300, %v292
        %s303 = sld [smem:[#allocation2 + $0x1]]
        %v304 = vstv %s303
        %v305 = vmul.f32 %v304, %v288
        %v306 = vadd.f32 %v301, %v305
        %v307 = vmul.f32 %v304, %v294
        %v308 = vadd.f32 %v302, %v307
        %s309 = sld [smem:[#allocation2 + $0x2]]
        %v310 = vstv %s309
        %v311 = vmul.f32 %v310, %v290
        %v312 = vadd.f32 %v306, %v311
        %v313 = vmul.f32 %v310, %v296
        %v314 = vadd.f32 %v308, %v313
        %v315 = vstv %s297
        %v316 = vmul.f32 %v312, %v315
        %v317 = vstv %s298
        %v318 = vadd.f32 %v316, %v317
        %v319 = vmul.f32 %v314, %v315
        %v320 = vadd.f32 %v319, %v317
        %v321 = vmax.f32 %v318, %v320
        %322 = vst [vmem:[%s285] sm:$0xff] %v321
        %s323 = sld [smem:[#allocation4 + $0x1]]
        %s324 = sld [smem:[#allocation6 + $0x1]]
        %s325 = sld [smem:[#allocation2 + $0x80]]
        %v326 = vstv %s325
        %v327 = vmul.f32 %v326, %v286
        %v328 = vmul.f32 %v326, %v292
        %s329 = sld [smem:[#allocation2 + $0x81]]
        %v330 = vstv %s329
        %v331 = vmul.f32 %v330, %v288
        %v332 = vadd.f32 %v327, %v331
        %v333 = vmul.f32 %v330, %v294
        %v334 = vadd.f32 %v328, %v333
        %s335 = sld [smem:[#allocation2 + $0x82]]
        %v336 = vstv %s335
        %v337 = vmul.f32 %v336, %v290
        %v338 = vadd.f32 %v332, %v337
        %v339 = vmul.f32 %v336, %v296
        %v340 = vadd.f32 %v334, %v339
        %v341 = vstv %s323
        %v342 = vmul.f32 %v338, %v341
        %v343 = vstv %s324
        %v344 = vadd.f32 %v342, %v343
        %v345 = vmul.f32 %v340, %v341
        %v346 = vadd.f32 %v345, %v343
        %v347 = vmax.f32 %v344, %v346
        %s348 = scalar_lea.vmem %s285, 8 [#allocation8]
        %349 = vst [vmem:[%s348] sm:$0xff] %v347
        %s350 = sld [smem:[#allocation4 + $0x2]]
        %s351 = sld [smem:[#allocation6 + $0x2]]
        %s352 = sld [smem:[#allocation2 + $0x100]]
        %v353 = vstv %s352
        %v354 = vmul.f32 %v353, %v286
        %v355 = vmul.f32 %v353, %v292
        %s356 = sld [smem:[#allocation2 + $0x101]]
        %v357 = vstv %s356
        %v358 = vmul.f32 %v357, %v288
        %v359 = vadd.f32 %v354, %v358
        %v360 = vmul.f32 %v357, %v294
        %v361 = vadd.f32 %v355, %v360
        %s362 = sld [smem:[#allocation2 + $0x102]]
        %v363 = vstv %s362
        %v364 = vmul.f32 %v363, %v290
        %v365 = vadd.f32 %v359, %v364
        %v366 = vmul.f32 %v363, %v296
        %v367 = vadd.f32 %v361, %v366
        %v368 = vstv %s350
        %v369 = vmul.f32 %v365, %v368
        %v370 = vstv %s351
        %v371 = vadd.f32 %v369, %v370
        %v372 = vmul.f32 %v367, %v368
        %v373 = vadd.f32 %v372, %v370
        %v374 = vmax.f32 %v371, %v373
        %s375 = scalar_lea.vmem %s285, 16 [#allocation8]
        %376 = vst [vmem:[%s375] sm:$0xff] %v374
        %s377 = sand.u32 %s114, 1
        %s378 = sand.u32 %s114, 1
        %s379 = smul.addr %s378, 24
        %s380 = scalar_lea.vmem [#allocation8], %s379
        // Predicated region
        $region87: #{conv_bn_pool.3} parent=69 // pred_check
          %p381 = pneg %p124
        $region88: #{conv_bn_pool.3} parent=69 // pred_check_branch
          %383 = sbr.rel (%p381) target = $region90
        $region89: #{conv_bn_pool.3} parent=69 // pred_region
          %s384 = smul.addr %s17, 8
          %s385 = scalar_lea.vmem %s4, %s384
          // Predicated region
          $region91: #{conv_bn_pool.3} parent=89 // pred_check
            _
          $region92: #{conv_bn_pool.3} parent=89 // pred_check_branch
            %387 = sbr.rel (0) target = $region94
          $region93: #{conv_bn_pool.3} parent=89 // pred_region
            // Predicated region
            $region95: #{conv_bn_pool.3} parent=93 // pred_check
              _
            $region96: #{conv_bn_pool.3} parent=93 // pred_check_branch
              %389 = sbr.rel (0) target = $region98
            $region97: #{conv_bn_pool.3} parent=93 // pred_region
              // Predicated region
              $region110: #{conv_bn_pool.3} parent=97 // pred_check
                _
              $region111: #{conv_bn_pool.3} parent=97 // pred_check_branch
                %409 = sbr.rel (0) target = $region113
              $region112: #{conv_bn_pool.3} parent=97 // pred_region
                loop: start=0, step=1, limit=1
                $region114: #{conv_bn_pool.3} parent=112 // loop_pre_header
                  _
                $region115: #{conv_bn_pool.3} parent=112 // loop_header
                  %s411 = sphi 0, %s415
                  %p412 = scmp.ge.s32.totalorder %s411, 1
                  %s416 = sphi %s380, %s380
                  %s417 = sphi %s385, %s385
                $region116: #{conv_bn_pool.3} parent=112 // loop_header_branch
                  %414 = sbr.rel (%p412) target = $region120
                $region117: #{conv_bn_pool.3} parent=112 // loop_body
                  %v418 = vld [vmem:[%s416] sm:$0xff]
                  %419 = vst [vmem:[%s417] sm:$0xff] %v418
                  %v420 = vld [vmem:[%s416 + $0x8] sm:$0xff]
                  %421 = vst [vmem:[%s417 + $0x10] sm:$0xff] %v420
                  %v422 = vld [vmem:[%s416 + $0x10] sm:$0xff]
                  %423 = vst [vmem:[%s417 + $0x20] sm:$0xff] %v422
                $region118: #{conv_bn_pool.3} parent=112 // loop_footer
                  %s415 = sadd.s32 1, %s411
                $region119: #{conv_bn_pool.3} parent=112 // loop_footer_branch
                  %410 = sbr.rel target = $region115
                $region120: #{conv_bn_pool.3} parent=112 // loop_exit
                  _
              $region113: #{conv_bn_pool.3} parent=97 // pred_fallthru
                _
              // Predicated region
              $region121: #{conv_bn_pool.3} parent=97 // pred_check
                _
              $region122: #{conv_bn_pool.3} parent=97 // pred_check_branch
                %425 = sbr.rel target = $region124
              $region123: #{conv_bn_pool.3} parent=97 // pred_region
                _
              $region124: #{conv_bn_pool.3} parent=97 // pred_fallthru
                _
            $region98: #{conv_bn_pool.3} parent=93 // pred_fallthru
              _
            // Predicated region
            $region99: #{conv_bn_pool.3} parent=93 // pred_check
              _
            $region100: #{conv_bn_pool.3} parent=93 // pred_check_branch
              %391 = sbr.rel target = $region102
            $region101: #{conv_bn_pool.3} parent=93 // pred_region
              %s393 = ssub.s32 256, 1
              loop: start=0, step=1, limit=1
              $region103: #{conv_bn_pool.3} parent=101 // loop_pre_header
                _
              $region104: #{conv_bn_pool.3} parent=101 // loop_header
                %s395 = sphi 0, %s399
                %p396 = scmp.ge.s32.totalorder %s395, 1
                %s400 = sphi %s380, %s380
                %s401 = sphi %s385, %s385
              $region105: #{conv_bn_pool.3} parent=101 // loop_header_branch
                %398 = sbr.rel (%p396) target = $region109
              $region106: #{conv_bn_pool.3} parent=101 // loop_body
                %v402 = vld [vmem:[%s400] sm:%s393]
                %403 = vst [vmem:[%s401] sm:%s393] %v402
                %v404 = vld [vmem:[%s400 + $0x8] sm:%s393]
                %405 = vst [vmem:[%s401 + $0x10] sm:%s393] %v404
                %v406 = vld [vmem:[%s400 + $0x10] sm:%s393]
                %407 = vst [vmem:[%s401 + $0x20] sm:%s393] %v406
              $region107: #{conv_bn_pool.3} parent=101 // loop_footer
                %s399 = sadd.s32 1, %s395
              $region108: #{conv_bn_pool.3} parent=101 // loop_footer_branch
                %394 = sbr.rel target = $region104
              $region109: #{conv_bn_pool.3} parent=101 // loop_exit
                _
            $region102: #{conv_bn_pool.3} parent=93 // pred_fallthru
              _
          $region94: #{conv_bn_pool.3} parent=89 // pred_fallthru
            _
          %426 = vnop
        $region90: #{conv_bn_pool.3} parent=69 // pred_fallthru
          _
      $region70: #{conv_bn_pool.3} parent=5 // pred_fallthru
        _
      %p427 = scmp.le.s32.totalorder 2, %s12
      // Predicated region
      $region125: #{conv_bn_pool.3} parent=5 // pred_check
        %p428 = pneg %p427
      $region126: #{conv_bn_pool.3} parent=5 // pred_check_branch
        %430 = sbr.rel (%p428) target = $region128
      $region127: #{conv_bn_pool.3} parent=5 // pred_region
        %s431 = ssub.s32 %s12, 2
        // Predicated region
        $region129: #{conv_bn_pool.3} parent=127 // pred_check
          %p432 = pneg %p130
        $region130: #{conv_bn_pool.3} parent=127 // pred_check_branch
          %434 = sbr.rel (%p432) target = $region132
        $region131: #{conv_bn_pool.3} parent=127 // pred_region
          %s435 = sand.u32 %s115, 1
          %s436 = sand.u32 %s115, 1
          %s437 = smul.addr %s436, 24
          %s438 = scalar_lea.vmem [#allocation8], %s437
        $region132: #{conv_bn_pool.3} parent=127 // pred_fallthru
          _
      $region128: #{conv_bn_pool.3} parent=5 // pred_fallthru
        _
    $region6: #{conv_bn_pool.3} parent=1 // loop_footer
      %s16 = sadd.s32 1, %s12
    $region7: #{conv_bn_pool.3} parent=1 // loop_footer_branch
      %11 = sbr.rel target = $region3
    $region8: #{conv_bn_pool.3} parent=1 // loop_exit
      _
    %439 = vsyncpa [#allocation3], 1
    %s440 = scalar_lea.sflag [#allocation3], 1
    %441 = vsyncpa %s440, 1
    %442 = vsyncpa [#allocation5], 1

</llo_original>
